<compile_context>
chip_gen: v7x
topology: tpu7x:2x2x1
jax: 0.10.0
libtpu: 0.0.40
codegen_flags: <defaults>
</compile_context>

<pallas_src>
import jax
import jax.numpy as jnp
from jax import lax
from jax.experimental import pallas as pl
from jax.experimental.pallas import tpu as pltpu

C1 = 256    # conv1 out channels
C2 = 128    # conv2 out channels
K1 = 5      # conv1 kernel size (padding=2)
K2 = 3      # conv2 kernel size (padding=1)
H1 = 100    # fc1 width (PyTorch)
H2 = 50     # fc2 width (PyTorch)
H1P = 128   # fc1 width padded to a full lane vreg
H2P = 64    # fc2 width padded to a power of two


def _cnn_kernel(xe_ref, xo_ref, w1_ref, b1_ref, w2_ref, b2_ref,
                wf1_ref, bf1_ref, wf2_ref, bf2_ref, wf3_ref, bf3_ref,
                o_ref, h2_s):
    N = xe_ref.shape[0]            # N = L2 * B, rows ordered r = p*B + b
    B = o_ref.shape[0]
    L2 = N // B
    H1p = wf1_ref.shape[2]

    # ---- Conv1d(C_in->256, k=5, pad=2) + ReLU + MaxPool1d(2), fused and
    # batched over all (position, batch) rows: two matmuls + one VPU max.
    # maxpool(relu(conv + bias)) == relu(max(even, odd) + bias)  (monotonic).
    w1 = w1_ref[...]                                            # (K1*C_in, C1) bf16
    he = jnp.dot(xe_ref[...], w1, preferred_element_type=jnp.float32)
    ho = jnp.dot(xo_ref[...], w1, preferred_element_type=jnp.float32)
    hp = jnp.maximum(jnp.maximum(he, ho) + b1_ref[...], 0.0)    # (N, C1) f32

    # ---- Conv1d(256->128, k=3, pad=1) + ReLU: three shifted-tap matmuls.
    # With rows r = p*B + b, the p-1 / p+1 taps are row shifts by -+B; rows
    # that fall into the zero padding (p == 0 / p == L2-1) are masked out.
    row = lax.broadcasted_iota(jnp.int32, hp.shape, 0)
    prev = jnp.where(row < B, 0.0, pltpu.roll(hp, shift=B, axis=0))
    nxt = jnp.where(row >= N - B, 0.0, pltpu.roll(hp, shift=N - B, axis=0))
    acc2 = jnp.dot(prev.astype(jnp.bfloat16), w2_ref[0],
                   preferred_element_type=jnp.float32)
    acc2 += jnp.dot(hp.astype(jnp.bfloat16), w2_ref[1],
                    preferred_element_type=jnp.float32)
    acc2 += jnp.dot(nxt.astype(jnp.bfloat16), w2_ref[2],
                    preferred_element_type=jnp.float32)
    h2_s[...] = jnp.maximum(acc2 + b2_ref[...], 0.0)            # (N, C2) f32

    # ---- FC1: contract (position, channel) without materializing the
    # flatten: accumulate (B, C2) @ (C2, H1) over positions (lane-dense,
    # no masked single-row stores, no sublane->lane repack).
    # TODO(synk): for large window_size, turn this into a grid axis over L2
    # chunks ("arbitrary") with wf1 BlockSpec-tiled and f1 kept in scratch so
    # wf1 never has to be fully VMEM-resident (v7x 64 MiB / v5e 16 MiB scoped).
    f1 = jnp.zeros((B, H1p), jnp.float32)
    for p in range(L2):
        chunk = h2_s[p * B:(p + 1) * B, :].astype(jnp.bfloat16)  # (B, C2)
        f1 += jnp.dot(chunk, wf1_ref[p], preferred_element_type=jnp.float32)
    f1 = jnp.maximum(f1 + bf1_ref[...], 0.0).astype(jnp.bfloat16)

    # ---- FC2 + FC3 (widths padded to 128 / 64; padded columns stay zero).
    f2 = jnp.maximum(
        jnp.dot(f1, wf2_ref[...], preferred_element_type=jnp.float32)
        + bf2_ref[...], 0.0).astype(jnp.bfloat16)
    o_ref[...] = (jnp.dot(f2, wf3_ref[...], preferred_element_type=jnp.float32)
                  + bf3_ref[...]).astype(o_ref.dtype)


def make_params(key, num_inputs, window_size, output_dim):
    """Deterministic synthetic parameters in PyTorch weight layouts (f32)."""
    L2 = window_size // 2
    flat = C2 * L2
    keys = jax.random.split(key, 10)

    def init(k, shape, fan_in):
        return jax.random.normal(k, shape, jnp.float32) / jnp.sqrt(fan_in)

    w1 = init(keys[0], (C1, num_inputs, K1), num_inputs * K1)
    b1 = init(keys[1], (C1,), num_inputs * K1)
    w2 = init(keys[2], (C2, C1, K2), C1 * K2)
    b2 = init(keys[3], (C2,), C1 * K2)
    wf1 = init(keys[4], (H1, flat), flat)
    bf1 = init(keys[5], (H1,), flat)
    wf2 = init(keys[6], (H2, H1), H1)
    bf2 = init(keys[7], (H2,), H1)
    wf3 = init(keys[8], (output_dim, H2), H2)
    bf3 = init(keys[9], (output_dim,), H2)
    return (w1, b1, w2, b2, wf1, bf1, wf2, bf2, wf3, bf3)


def prepare_params(params, window_size):
    """One-time relayout of PyTorch-layout params into kernel layouts (bf16)."""
    w1, b1, w2, b2, wf1, bf1, wf2, bf2, wf3, bf3 = params
    L2 = window_size // 2
    num_inputs = w1.shape[1]
    # im2col-flattened conv1 weight: row index = k*C_in + c (k major).
    w1_k = jnp.transpose(w1, (2, 1, 0)).reshape(K1 * num_inputs, C1)
    # conv2 weight as K2 separate (C1, C2) tap blocks.
    w2_k = jnp.transpose(w2, (2, 1, 0))                            # (K2, C1, C2)
    # FC1 as per-position (C2, H1) blocks matching PyTorch's channel-major
    # nn.Flatten() of the (C2, L2) conv output; H1 zero-padded 100 -> 128.
    wf1_k = jnp.transpose(wf1.reshape(H1, C2, L2), (2, 1, 0))      # (L2, C2, H1)
    wf1_k = jnp.pad(wf1_k, ((0, 0), (0, 0), (0, H1P - H1)))
    bf1_k = jnp.pad(bf1, (0, H1P - H1))
    wf2_k = jnp.pad(wf2.T, ((0, H1P - H1), (0, H2P - H2)))
    bf2_k = jnp.pad(bf2, (0, H2P - H2))
    wf3_k = jnp.pad(wf3.T, ((0, H2P - H2), (0, 0)))
    bf16 = jnp.bfloat16
    return (w1_k.astype(bf16), b1.reshape(1, -1),
            w2_k.astype(bf16), b2.reshape(1, -1),
            wf1_k.astype(bf16), bf1_k.reshape(1, -1),
            wf2_k.astype(bf16), bf2_k.reshape(1, -1),
            wf3_k.astype(bf16), bf3.reshape(1, -1))


def cnn_feature_extractor(x, kparams, num_inputs, window_size, output_dim):
    B = x.shape[0]
    L2 = window_size // 2

    # Glue: PyTorch's x.view(B, C_in, L) -> channels-last -> pad=2 -> im2col,
    # split by even/odd conv-output position so MaxPool1d(2) becomes a max.
    # Rows are ordered r = position*B + batch so conv2's +-1 taps are plain
    # row shifts and FC1's per-position chunks are contiguous.
    # TODO(synk): for large window_size / v5e, build these taps in-kernel from
    # the padded (B, L+4, C_in) input to avoid the K1x im2col HBM expansion.
    x_cl = jnp.transpose(x.reshape(B, num_inputs, window_size), (0, 2, 1))
    xp = jnp.pad(x_cl, ((0, 0), (2, 2), (0, 0)))                   # (B, L+4, C_in)
    xe = jnp.concatenate(
        [xp[:, k:k + 2 * L2:2, :] for k in range(K1)], axis=-1)    # (B, L2, K1*C_in)
    xo = jnp.concatenate(
        [xp[:, k + 1:k + 1 + 2 * L2:2, :] for k in range(K1)], axis=-1)
    xe = jnp.transpose(xe, (1, 0, 2)).reshape(L2 * B, K1 * num_inputs)
    xo = jnp.transpose(xo, (1, 0, 2)).reshape(L2 * B, K1 * num_inputs)

    args = (xe.astype(jnp.bfloat16), xo.astype(jnp.bfloat16)) + tuple(kparams)
    vmem = pl.BlockSpec(memory_space=pltpu.MemorySpace.VMEM)
    # TODO(synk): for large B, add a batch-chunk grid axis with
    # dimension_semantics=("parallel",) so v7x's two TensorCores split the work.
    return pl.pallas_call(
        _cnn_kernel,
        out_shape=jax.ShapeDtypeStruct((B, output_dim), jnp.float32),
        in_specs=[vmem] * len(args),
        out_specs=vmem,
        scratch_shapes=[pltpu.VMEM((L2 * B, C2), jnp.float32)],    # conv2 output
        compiler_params=pltpu.CompilerParams(vmem_limit_bytes=32 * 1024 * 1024),
    )(*args)


def reference(x, params, num_inputs, window_size):
    """Pure-JAX f32 reference mirroring the PyTorch module exactly."""
    w1, b1, w2, b2, wf1, bf1, wf2, bf2, wf3, bf3 = params
    B = x.shape[0]
    h = x.reshape(B, num_inputs, window_size)
    h = lax.conv_general_dilated(h, w1, (1,), [(2, 2)],
                                 dimension_numbers=("NCH", "OIH", "NCH"))
    h = jnp.maximum(h + b1[None, :, None], 0.0)
    L2 = window_size // 2
    h = h[:, :, :2 * L2].reshape(B, C1, L2, 2).max(axis=3)          # MaxPool1d(2)
    h = lax.conv_general_dilated(h, w2, (1,), [(1, 1)],
                                 dimension_numbers=("NCH", "OIH", "NCH"))
    h = jnp.maximum(h + b2[None, :, None], 0.0)
    f = h.reshape(B, -1)                                            # channel-major flatten
    f = jnp.maximum(f @ wf1.T + bf1, 0.0)
    f = jnp.maximum(f @ wf2.T + bf2, 0.0)
    return f @ wf3.T + bf3


if __name__ == "__main__":
    num_inputs, window_size, output_dim = 4, 16, 8
    B = 2
    key = jax.random.PRNGKey(0)
    pkey, xkey = jax.random.split(key)
    params = make_params(pkey, num_inputs, window_size, output_dim)
    kparams = prepare_params(params, window_size)    # one-time weight relayout
    x = jax.random.normal(xkey, (B, num_inputs, window_size), jnp.float32)

    out = cnn_feature_extractor(x, kparams, num_inputs, window_size, output_dim)
    out = jax.block_until_ready(out)

    ref = reference(x, params, num_inputs, window_size)
    assert out.shape == (B, output_dim)
    assert bool(jnp.all(jnp.isfinite(out)))
    # bf16 matmul operands with f32 accumulation: a few 1e-3..1e-2 abs error
    # vs the f32 reference is expected; layout bugs would show up as O(1).
    assert jnp.allclose(out, ref, rtol=5e-2, atol=5e-2), (out, ref)
    print("KERNEL_OK")
</pallas_src>

<mosaic_0001>
module attributes {stable_mosaic.version = 11 : i64} {
  func.func @_cnn_kernel(%arg0: memref<16x20xbf16, #tpu.memory_space<vmem>>, %arg1: memref<16x20xbf16, #tpu.memory_space<vmem>>, %arg2: memref<20x256xbf16, #tpu.memory_space<vmem>>, %arg3: memref<1x256xf32, #tpu.memory_space<vmem>>, %arg4: memref<3x256x128xbf16, #tpu.memory_space<vmem>>, %arg5: memref<1x128xf32, #tpu.memory_space<vmem>>, %arg6: memref<8x128x128xbf16, #tpu.memory_space<vmem>>, %arg7: memref<1x128xf32, #tpu.memory_space<vmem>>, %arg8: memref<128x64xbf16, #tpu.memory_space<vmem>>, %arg9: memref<1x64xf32, #tpu.memory_space<vmem>>, %arg10: memref<64x8xbf16, #tpu.memory_space<vmem>>, %arg11: memref<1x8xf32, #tpu.memory_space<vmem>>, %arg12: memref<2x8xf32, #tpu.memory_space<vmem>>, %arg13: memref<16x128xf32, #tpu.memory_space<vmem>>) attributes {dimension_semantics = [], scalar_prefetch = 0 : i64, scratch_operands = 1 : i64, tpu.core_type = #tpu.core_type<tc>} {
    %c0 = arith.constant 0 : index
    %c0_0 = arith.constant 0 : index
    %0 = vector.load %arg2[%c0, %c0_0] : memref<20x256xbf16, #tpu.memory_space<vmem>>, vector<20x256xbf16>
    %c0_1 = arith.constant 0 : index
    %c0_2 = arith.constant 0 : index
    %1 = vector.load %arg0[%c0_1, %c0_2] : memref<16x20xbf16, #tpu.memory_space<vmem>>, vector<16x20xbf16>
    %cst = arith.constant dense<0.000000e+00> : vector<16x256xf32>
    %2 = tpu.matmul %1, %0, %cst {dimension_numbers = #tpu.dot_dimension_numbers<[1], [0], [0], [1], [0, 0, 1, 1], [], []>} : vector<16x20xbf16>, vector<20x256xbf16>, vector<16x256xf32> -> vector<16x256xf32>
    %c0_3 = arith.constant 0 : index
    %c0_4 = arith.constant 0 : index
    %3 = vector.load %arg1[%c0_3, %c0_4] : memref<16x20xbf16, #tpu.memory_space<vmem>>, vector<16x20xbf16>
    %cst_5 = arith.constant dense<0.000000e+00> : vector<16x256xf32>
    %4 = tpu.matmul %3, %0, %cst_5 {dimension_numbers = #tpu.dot_dimension_numbers<[1], [0], [0], [1], [0, 0, 1, 1], [], []>} : vector<16x20xbf16>, vector<20x256xbf16>, vector<16x256xf32> -> vector<16x256xf32>
    %5 = arith.maximumf %2, %4 : vector<16x256xf32>
    %c0_6 = arith.constant 0 : index
    %c0_7 = arith.constant 0 : index
    %6 = vector.load %arg3[%c0_6, %c0_7] : memref<1x256xf32, #tpu.memory_space<vmem>>, vector<1x256xf32>
    %7 = vector.broadcast %6 : vector<1x256xf32> to vector<16x256xf32>
    %8 = arith.addf %5, %7 : vector<16x256xf32>
    %cst_8 = arith.constant 0.000000e+00 : f32
    %9 = vector.broadcast %cst_8 : f32 to vector<16x256xf32>
    %10 = arith.maximumf %8, %9 : vector<16x256xf32>
    %11 = tpu.iota {dimensions = array<i32: 0>} : vector<16x256xi32>
    %c2_i32 = arith.constant 2 : i32
    %12 = vector.broadcast %c2_i32 : i32 to vector<16x256xi32>
    %13 = arith.cmpi slt, %11, %12 : vector<16x256xi32>
    %c2_i32_9 = arith.constant 2 : i32
    %14 = tpu.dynamic_rotate %10 by %c2_i32_9 dim 0 : vector<16x256xf32>, i32 -> vector<16x256xf32>
    %cst_10 = arith.constant 0.000000e+00 : f32
    %15 = vector.broadcast %cst_10 : f32 to vector<16x256xf32>
    %16 = arith.select %13, %15, %14 : vector<16x256xi1>, vector<16x256xf32>
    %c14_i32 = arith.constant 14 : i32
    %17 = vector.broadcast %c14_i32 : i32 to vector<16x256xi32>
    %18 = arith.cmpi sge, %11, %17 : vector<16x256xi32>
    %c14_i32_11 = arith.constant 14 : i32
    %19 = tpu.dynamic_rotate %10 by %c14_i32_11 dim 0 : vector<16x256xf32>, i32 -> vector<16x256xf32>
    %cst_12 = arith.constant 0.000000e+00 : f32
    %20 = vector.broadcast %cst_12 : f32 to vector<16x256xf32>
    %21 = arith.select %18, %20, %19 : vector<16x256xi1>, vector<16x256xf32>
    %22 = arith.truncf %16 : vector<16x256xf32> to vector<16x256xbf16>
    %c0_13 = arith.constant 0 : index
    %c0_14 = arith.constant 0 : index
    %c0_15 = arith.constant 0 : index
    %23 = vector.load %arg4[%c0_13, %c0_14, %c0_15] : memref<3x256x128xbf16, #tpu.memory_space<vmem>>, vector<1x256x128xbf16>
    %24 = vector.shape_cast %23 : vector<1x256x128xbf16> to vector<256x128xbf16>
    %cst_16 = arith.constant dense<0.000000e+00> : vector<16x128xf32>
    %25 = tpu.matmul %22, %24, %cst_16 {dimension_numbers = #tpu.dot_dimension_numbers<[1], [0], [0], [1], [0, 0, 1, 1], [], []>} : vector<16x256xbf16>, vector<256x128xbf16>, vector<16x128xf32> -> vector<16x128xf32>
    %26 = arith.truncf %10 : vector<16x256xf32> to vector<16x256xbf16>
    %c1 = arith.constant 1 : index
    %c0_17 = arith.constant 0 : index
    %c0_18 = arith.constant 0 : index
    %27 = vector.load %arg4[%c1, %c0_17, %c0_18] : memref<3x256x128xbf16, #tpu.memory_space<vmem>>, vector<1x256x128xbf16>
    %28 = vector.shape_cast %27 : vector<1x256x128xbf16> to vector<256x128xbf16>
    %cst_19 = arith.constant dense<0.000000e+00> : vector<16x128xf32>
    %29 = tpu.matmul %26, %28, %cst_19 {dimension_numbers = #tpu.dot_dimension_numbers<[1], [0], [0], [1], [0, 0, 1, 1], [], []>} : vector<16x256xbf16>, vector<256x128xbf16>, vector<16x128xf32> -> vector<16x128xf32>
    %30 = arith.addf %25, %29 : vector<16x128xf32>
    %31 = arith.truncf %21 : vector<16x256xf32> to vector<16x256xbf16>
    %c2 = arith.constant 2 : index
    %c0_20 = arith.constant 0 : index
    %c0_21 = arith.constant 0 : index
    %32 = vector.load %arg4[%c2, %c0_20, %c0_21] : memref<3x256x128xbf16, #tpu.memory_space<vmem>>, vector<1x256x128xbf16>
    %33 = vector.shape_cast %32 : vector<1x256x128xbf16> to vector<256x128xbf16>
    %cst_22 = arith.constant dense<0.000000e+00> : vector<16x128xf32>
    %34 = tpu.matmul %31, %33, %cst_22 {dimension_numbers = #tpu.dot_dimension_numbers<[1], [0], [0], [1], [0, 0, 1, 1], [], []>} : vector<16x256xbf16>, vector<256x128xbf16>, vector<16x128xf32> -> vector<16x128xf32>
    %35 = arith.addf %30, %34 : vector<16x128xf32>
    %c0_23 = arith.constant 0 : index
    %c0_24 = arith.constant 0 : index
    %36 = vector.load %arg5[%c0_23, %c0_24] : memref<1x128xf32, #tpu.memory_space<vmem>>, vector<1x128xf32>
    %37 = vector.broadcast %36 : vector<1x128xf32> to vector<16x128xf32>
    %38 = arith.addf %35, %37 : vector<16x128xf32>
    %cst_25 = arith.constant 0.000000e+00 : f32
    %39 = vector.broadcast %cst_25 : f32 to vector<16x128xf32>
    %40 = arith.maximumf %38, %39 : vector<16x128xf32>
    %c0_26 = arith.constant 0 : index
    %c0_27 = arith.constant 0 : index
    %41 = vector.load %arg13[%c0_26, %c0_27] : memref<16x128xf32, #tpu.memory_space<vmem>>, vector<16x128xf32>
    tpu.vector_store %arg13[%c0_26, %c0_27], %40 {strides = array<i32>} : memref<16x128xf32, #tpu.memory_space<vmem>>, vector<16x128xf32>,
    %cst_28 = arith.constant 0.000000e+00 : f32
    %42 = vector.broadcast %cst_28 : f32 to vector<2x128xf32>
    %c0_29 = arith.constant 0 : index
    %c0_30 = arith.constant 0 : index
    %43 = vector.load %arg13[%c0_29, %c0_30] : memref<16x128xf32, #tpu.memory_space<vmem>>, vector<2x128xf32>
    %44 = arith.truncf %43 : vector<2x128xf32> to vector<2x128xbf16>
    %c0_31 = arith.constant 0 : index
    %c0_32 = arith.constant 0 : index
    %c0_33 = arith.constant 0 : index
    %45 = vector.load %arg6[%c0_31, %c0_32, %c0_33] : memref<8x128x128xbf16, #tpu.memory_space<vmem>>, vector<1x128x128xbf16>
    %46 = vector.shape_cast %45 : vector<1x128x128xbf16> to vector<128x128xbf16>
    %cst_34 = arith.constant dense<0.000000e+00> : vector<2x128xf32>
    %47 = tpu.matmul %44, %46, %cst_34 {dimension_numbers = #tpu.dot_dimension_numbers<[1], [0], [0], [1], [0, 0, 1, 1], [], []>} : vector<2x128xbf16>, vector<128x128xbf16>, vector<2x128xf32> -> vector<2x128xf32>
    %48 = arith.addf %42, %47 : vector<2x128xf32>
    %c2_35 = arith.constant 2 : index
    %c0_36 = arith.constant 0 : index
    %49 = vector.load %arg13[%c2_35, %c0_36] : memref<16x128xf32, #tpu.memory_space<vmem>>, vector<2x128xf32>
    %50 = arith.truncf %49 : vector<2x128xf32> to vector<2x128xbf16>
    %c1_37 = arith.constant 1 : index
    %c0_38 = arith.constant 0 : index
    %c0_39 = arith.constant 0 : index
    %51 = vector.load %arg6[%c1_37, %c0_38, %c0_39] : memref<8x128x128xbf16, #tpu.memory_space<vmem>>, vector<1x128x128xbf16>
    %52 = vector.shape_cast %51 : vector<1x128x128xbf16> to vector<128x128xbf16>
    %cst_40 = arith.constant dense<0.000000e+00> : vector<2x128xf32>
    %53 = tpu.matmul %50, %52, %cst_40 {dimension_numbers = #tpu.dot_dimension_numbers<[1], [0], [0], [1], [0, 0, 1, 1], [], []>} : vector<2x128xbf16>, vector<128x128xbf16>, vector<2x128xf32> -> vector<2x128xf32>
    %54 = arith.addf %48, %53 : vector<2x128xf32>
    %c4 = arith.constant 4 : index
    %c0_41 = arith.constant 0 : index
    %55 = vector.load %arg13[%c4, %c0_41] : memref<16x128xf32, #tpu.memory_space<vmem>>, vector<2x128xf32>
    %56 = arith.truncf %55 : vector<2x128xf32> to vector<2x128xbf16>
    %c2_42 = arith.constant 2 : index
    %c0_43 = arith.constant 0 : index
    %c0_44 = arith.constant 0 : index
    %57 = vector.load %arg6[%c2_42, %c0_43, %c0_44] : memref<8x128x128xbf16, #tpu.memory_space<vmem>>, vector<1x128x128xbf16>
    %58 = vector.shape_cast %57 : vector<1x128x128xbf16> to vector<128x128xbf16>
    %cst_45 = arith.constant dense<0.000000e+00> : vector<2x128xf32>
    %59 = tpu.matmul %56, %58, %cst_45 {dimension_numbers = #tpu.dot_dimension_numbers<[1], [0], [0], [1], [0, 0, 1, 1], [], []>} : vector<2x128xbf16>, vector<128x128xbf16>, vector<2x128xf32> -> vector<2x128xf32>
    %60 = arith.addf %54, %59 : vector<2x128xf32>
    %c6 = arith.constant 6 : index
    %c0_46 = arith.constant 0 : index
    %61 = vector.load %arg13[%c6, %c0_46] : memref<16x128xf32, #tpu.memory_space<vmem>>, vector<2x128xf32>
    %62 = arith.truncf %61 : vector<2x128xf32> to vector<2x128xbf16>
    %c3 = arith.constant 3 : index
    %c0_47 = arith.constant 0 : index
    %c0_48 = arith.constant 0 : index
    %63 = vector.load %arg6[%c3, %c0_47, %c0_48] : memref<8x128x128xbf16, #tpu.memory_space<vmem>>, vector<1x128x128xbf16>
    %64 = vector.shape_cast %63 : vector<1x128x128xbf16> to vector<128x128xbf16>
    %cst_49 = arith.constant dense<0.000000e+00> : vector<2x128xf32>
    %65 = tpu.matmul %62, %64, %cst_49 {dimension_numbers = #tpu.dot_dimension_numbers<[1], [0], [0], [1], [0, 0, 1, 1], [], []>} : vector<2x128xbf16>, vector<128x128xbf16>, vector<2x128xf32> -> vector<2x128xf32>
    %66 = arith.addf %60, %65 : vector<2x128xf32>
    %c8 = arith.constant 8 : index
    %c0_50 = arith.constant 0 : index
    %67 = vector.load %arg13[%c8, %c0_50] : memref<16x128xf32, #tpu.memory_space<vmem>>, vector<2x128xf32>
    %68 = arith.truncf %67 : vector<2x128xf32> to vector<2x128xbf16>
    %c4_51 = arith.constant 4 : index
    %c0_52 = arith.constant 0 : index
    %c0_53 = arith.constant 0 : index
    %69 = vector.load %arg6[%c4_51, %c0_52, %c0_53] : memref<8x128x128xbf16, #tpu.memory_space<vmem>>, vector<1x128x128xbf16>
    %70 = vector.shape_cast %69 : vector<1x128x128xbf16> to vector<128x128xbf16>
    %cst_54 = arith.constant dense<0.000000e+00> : vector<2x128xf32>
    %71 = tpu.matmul %68, %70, %cst_54 {dimension_numbers = #tpu.dot_dimension_numbers<[1], [0], [0], [1], [0, 0, 1, 1], [], []>} : vector<2x128xbf16>, vector<128x128xbf16>, vector<2x128xf32> -> vector<2x128xf32>
    %72 = arith.addf %66, %71 : vector<2x128xf32>
    %c10 = arith.constant 10 : index
    %c0_55 = arith.constant 0 : index
    %73 = vector.load %arg13[%c10, %c0_55] : memref<16x128xf32, #tpu.memory_space<vmem>>, vector<2x128xf32>
    %74 = arith.truncf %73 : vector<2x128xf32> to vector<2x128xbf16>
    %c5 = arith.constant 5 : index
    %c0_56 = arith.constant 0 : index
    %c0_57 = arith.constant 0 : index
    %75 = vector.load %arg6[%c5, %c0_56, %c0_57] : memref<8x128x128xbf16, #tpu.memory_space<vmem>>, vector<1x128x128xbf16>
    %76 = vector.shape_cast %75 : vector<1x128x128xbf16> to vector<128x128xbf16>
    %cst_58 = arith.constant dense<0.000000e+00> : vector<2x128xf32>
    %77 = tpu.matmul %74, %76, %cst_58 {dimension_numbers = #tpu.dot_dimension_numbers<[1], [0], [0], [1], [0, 0, 1, 1], [], []>} : vector<2x128xbf16>, vector<128x128xbf16>, vector<2x128xf32> -> vector<2x128xf32>
    %78 = arith.addf %72, %77 : vector<2x128xf32>
    %c12 = arith.constant 12 : index
    %c0_59 = arith.constant 0 : index
    %79 = vector.load %arg13[%c12, %c0_59] : memref<16x128xf32, #tpu.memory_space<vmem>>, vector<2x128xf32>
    %80 = arith.truncf %79 : vector<2x128xf32> to vector<2x128xbf16>
    %c6_60 = arith.constant 6 : index
    %c0_61 = arith.constant 0 : index
    %c0_62 = arith.constant 0 : index
    %81 = vector.load %arg6[%c6_60, %c0_61, %c0_62] : memref<8x128x128xbf16, #tpu.memory_space<vmem>>, vector<1x128x128xbf16>
    %82 = vector.shape_cast %81 : vector<1x128x128xbf16> to vector<128x128xbf16>
    %cst_63 = arith.constant dense<0.000000e+00> : vector<2x128xf32>
    %83 = tpu.matmul %80, %82, %cst_63 {dimension_numbers = #tpu.dot_dimension_numbers<[1], [0], [0], [1], [0, 0, 1, 1], [], []>} : vector<2x128xbf16>, vector<128x128xbf16>, vector<2x128xf32> -> vector<2x128xf32>
    %84 = arith.addf %78, %83 : vector<2x128xf32>
    %c14 = arith.constant 14 : index
    %c0_64 = arith.constant 0 : index
    %85 = vector.load %arg13[%c14, %c0_64] : memref<16x128xf32, #tpu.memory_space<vmem>>, vector<2x128xf32>
    %86 = arith.truncf %85 : vector<2x128xf32> to vector<2x128xbf16>
    %c7 = arith.constant 7 : index
    %c0_65 = arith.constant 0 : index
    %c0_66 = arith.constant 0 : index
    %87 = vector.load %arg6[%c7, %c0_65, %c0_66] : memref<8x128x128xbf16, #tpu.memory_space<vmem>>, vector<1x128x128xbf16>
    %88 = vector.shape_cast %87 : vector<1x128x128xbf16> to vector<128x128xbf16>
    %cst_67 = arith.constant dense<0.000000e+00> : vector<2x128xf32>
    %89 = tpu.matmul %86, %88, %cst_67 {dimension_numbers = #tpu.dot_dimension_numbers<[1], [0], [0], [1], [0, 0, 1, 1], [], []>} : vector<2x128xbf16>, vector<128x128xbf16>, vector<2x128xf32> -> vector<2x128xf32>
    %90 = arith.addf %84, %89 : vector<2x128xf32>
    %c0_68 = arith.constant 0 : index
    %c0_69 = arith.constant 0 : index
    %91 = vector.load %arg7[%c0_68, %c0_69] : memref<1x128xf32, #tpu.memory_space<vmem>>, vector<1x128xf32>
    %92 = vector.broadcast %91 : vector<1x128xf32> to vector<2x128xf32>
    %93 = arith.addf %90, %92 : vector<2x128xf32>
    %cst_70 = arith.constant 0.000000e+00 : f32
    %94 = vector.broadcast %cst_70 : f32 to vector<2x128xf32>
    %95 = arith.maximumf %93, %94 : vector<2x128xf32>
    %96 = arith.truncf %95 : vector<2x128xf32> to vector<2x128xbf16>
    %c0_71 = arith.constant 0 : index
    %c0_72 = arith.constant 0 : index
    %97 = vector.load %arg8[%c0_71, %c0_72] : memref<128x64xbf16, #tpu.memory_space<vmem>>, vector<128x64xbf16>
    %cst_73 = arith.constant dense<0.000000e+00> : vector<2x64xf32>
    %98 = tpu.matmul %96, %97, %cst_73 {dimension_numbers = #tpu.dot_dimension_numbers<[1], [0], [0], [1], [0, 0, 1, 1], [], []>} : vector<2x128xbf16>, vector<128x64xbf16>, vector<2x64xf32> -> vector<2x64xf32>
    %c0_74 = arith.constant 0 : index
    %c0_75 = arith.constant 0 : index
    %99 = vector.load %arg9[%c0_74, %c0_75] : memref<1x64xf32, #tpu.memory_space<vmem>>, vector<1x64xf32>
    %100 = vector.broadcast %99 : vector<1x64xf32> to vector<2x64xf32>
    %101 = arith.addf %98, %100 : vector<2x64xf32>
    %cst_76 = arith.constant 0.000000e+00 : f32
    %102 = vector.broadcast %cst_76 : f32 to vector<2x64xf32>
    %103 = arith.maximumf %101, %102 : vector<2x64xf32>
    %104 = arith.truncf %103 : vector<2x64xf32> to vector<2x64xbf16>
    %c0_77 = arith.constant 0 : index
    %c0_78 = arith.constant 0 : index
    %105 = vector.load %arg10[%c0_77, %c0_78] : memref<64x8xbf16, #tpu.memory_space<vmem>>, vector<64x8xbf16>
    %cst_79 = arith.constant dense<0.000000e+00> : vector<2x8xf32>
    %106 = tpu.matmul %104, %105, %cst_79 {dimension_numbers = #tpu.dot_dimension_numbers<[1], [0], [0], [1], [0, 0, 1, 1], [], []>} : vector<2x64xbf16>, vector<64x8xbf16>, vector<2x8xf32> -> vector<2x8xf32>
    %c0_80 = arith.constant 0 : index
    %c0_81 = arith.constant 0 : index
    %107 = vector.load %arg11[%c0_80, %c0_81] : memref<1x8xf32, #tpu.memory_space<vmem>>, vector<1x8xf32>
    %108 = vector.broadcast %107 : vector<1x8xf32> to vector<2x8xf32>
    %109 = arith.addf %106, %108 : vector<2x8xf32>
    %c0_82 = arith.constant 0 : index
    %c0_83 = arith.constant 0 : index
    %110 = vector.load %arg12[%c0_82, %c0_83] : memref<2x8xf32, #tpu.memory_space<vmem>>, vector<2x8xf32>
    tpu.vector_store %arg12[%c0_82, %c0_83], %109 {strides = array<i32>} : memref<2x8xf32, #tpu.memory_space<vmem>>, vector<2x8xf32>,
    return
  }
}

</mosaic_0001>

<llo_original>
// kernel: tpu_custom_call.1
$region0: #{tpu_custom_call.1}
  #allocation0 [shape = 'u32[]', space=smem, size = 0x4, offset = 0x4, fixed_abs, tag = 'smem constant byte address 0x4 - core index']
  #allocation1 [shape = 'u32[144,128]{1,0:T(1,128)}', space=vmem, size = 0x12000, scoped, tag = 'internal scratch']
  #allocation2 [shape = 'f32[16,128]{1,0:T(8,128)}', space=vmem, size = 0x2000, scoped, tag = 'scratch operand']
  %s0 = inlined_call_operand.vmem [shape: bf16[16,20], index: 0, kind: input, shape index: {}]
  %s1 = inlined_call_operand.vmem [shape: bf16[16,20], index: 1, kind: input, shape index: {}]
  %s2 = inlined_call_operand.vmem [shape: bf16[20,256], index: 2, kind: input, shape index: {}]
  %s3 = inlined_call_operand.vmem [shape: f32[1,256], index: 3, kind: input, shape index: {}]
  %s4 = inlined_call_operand.hbm [shape: bf16[3,256,128], index: 4, kind: input, shape index: {}]
  %s5 = inlined_call_operand.vmem [shape: f32[1,128], index: 5, kind: input, shape index: {}]
  %s6 = inlined_call_operand.hbm [shape: bf16[8,128,128], index: 6, kind: input, shape index: {}]
  %s7 = inlined_call_operand.vmem [shape: f32[1,128], index: 7, kind: input, shape index: {}]
  %s8 = inlined_call_operand.vmem [shape: bf16[128,64], index: 8, kind: input, shape index: {}]
  %s9 = inlined_call_operand.vmem [shape: f32[1,64], index: 9, kind: input, shape index: {}]
  %s10 = inlined_call_operand.vmem [shape: bf16[64,8], index: 10, kind: input, shape index: {}]
  %s11 = inlined_call_operand.vmem [shape: f32[1,8], index: 11, kind: input, shape index: {}]
  %s12 = inlined_call_operand.hbm [shape: f32[2,8], index: 12, kind: output, shape index: {}]
  %s13 = sld [smem:[#allocation0]]
  $region66: #{tpu_custom_call.1} parent=0
    _
  %s15 = ssub.s32 1, %s13
  %s16 = scalar_select 0, %s15, %s13
  $region1: #{tpu_custom_call.1} parent=0
    #allocation3 [shape = 'u8[196608]{0}', space=vmem, size = 0x30000, scoped, tag = 'input window, operand 4, single buffered']
    #allocation4 [shape = 's32[1]{0}', space=sflag, size = 0x4, scoped, tag = 'scoped memory for tpu_custom_call.1']
    #allocation5 [shape = 's32[1]{0}', space=sflag, size = 0x4, scoped, tag = 'scoped memory for tpu_custom_call.1']
    #allocation6 [shape = 'u8[262144]{0}', space=vmem, size = 0x40000, scoped, tag = 'input window, operand 6, single buffered']
    #allocation7 [shape = 's32[1]{0}', space=sflag, size = 0x4, scoped, tag = 'scoped memory for tpu_custom_call.1']
    #allocation8 [shape = 'u8[1024]{0}', space=vmem, size = 0x400, scoped, tag = 'output window, operand 0, single buffered']
    %17 = vsyncpa [#allocation4], 0
    %18 = vsyncpa [#allocation7], 0
    %19 = vsyncpa [#allocation5], 0
    // Predicated region
    $region2: #{tpu_custom_call.1} parent=1 // pred_check
      _
    $region3: #{tpu_custom_call.1} parent=1 // pred_check_branch
      %21 = sbr.rel (0) target = $region5
    $region4: #{tpu_custom_call.1} parent=1 // pred_region
      _
    $region5: #{tpu_custom_call.1} parent=1 // pred_fallthru
      _
    // Predicated region
    $region6: #{tpu_custom_call.1} parent=1 // pred_check
      _
    $region7: #{tpu_custom_call.1} parent=1 // pred_check_branch
      %23 = sbr.rel (0) target = $region9
    $region8: #{tpu_custom_call.1} parent=1 // pred_region
      _
    $region9: #{tpu_custom_call.1} parent=1 // pred_fallthru
      _
    // Predicated region
    $region10: #{tpu_custom_call.1} parent=1 // pred_check
      _
    $region11: #{tpu_custom_call.1} parent=1 // pred_check_branch
      %25 = sbr.rel (0) target = $region13
    $region12: #{tpu_custom_call.1} parent=1 // pred_region
      _
    $region13: #{tpu_custom_call.1} parent=1 // pred_fallthru
      _
    // Predicated region
    $region14: #{tpu_custom_call.1} parent=1 // pred_check
      _
    $region15: #{tpu_custom_call.1} parent=1 // pred_check_branch
      %27 = sbr.rel (0) target = $region17
    $region16: #{tpu_custom_call.1} parent=1 // pred_region
      _
    $region17: #{tpu_custom_call.1} parent=1 // pred_fallthru
      _
    // Predicated region
    $region18: #{tpu_custom_call.1} parent=1 // pred_check
      _
    $region19: #{tpu_custom_call.1} parent=1 // pred_check_branch
      %29 = sbr.rel (0) target = $region21
    $region20: #{tpu_custom_call.1} parent=1 // pred_region
      %s31 = ssub.s32 6144, 6144
      %32 = vsyncadd [#allocation4], %s31
      %s33 = sshll.u32 [#allocation3], 4
      %s34 = int_to_ptr.vmem [resolvable:$true] %s33
      %39 = dma.hbm_to_vmem [thread:$0]  %s4, 6144, %s34, [#allocation4], 64, 64, 4
    $region21: #{tpu_custom_call.1} parent=1 // pred_fallthru
      _
    // Predicated region
    $region22: #{tpu_custom_call.1} parent=1 // pred_check
      _
    $region23: #{tpu_custom_call.1} parent=1 // pred_check_branch
      %41 = sbr.rel (0) target = $region25
    $region24: #{tpu_custom_call.1} parent=1 // pred_region
      _
    $region25: #{tpu_custom_call.1} parent=1 // pred_fallthru
      _
    // Predicated region
    $region26: #{tpu_custom_call.1} parent=1 // pred_check
      _
    $region27: #{tpu_custom_call.1} parent=1 // pred_check_branch
      %43 = sbr.rel (0) target = $region29
    $region28: #{tpu_custom_call.1} parent=1 // pred_region
      %s45 = ssub.s32 8192, 8192
      %46 = vsyncadd [#allocation7], %s45
      %s47 = sshll.u32 [#allocation6], 4
      %s48 = int_to_ptr.vmem [resolvable:$true] %s47
      %53 = dma.hbm_to_vmem [thread:$0]  %s6, 8192, %s48, [#allocation7], 64, 64, 4
    $region29: #{tpu_custom_call.1} parent=1 // pred_fallthru
      _
    // Predicated region
    $region30: #{tpu_custom_call.1} parent=1 // pred_check
      _
    $region31: #{tpu_custom_call.1} parent=1 // pred_check_branch
      %55 = sbr.rel (0) target = $region33
    $region32: #{tpu_custom_call.1} parent=1 // pred_region
      _
    $region33: #{tpu_custom_call.1} parent=1 // pred_fallthru
      _
    // Predicated region
    $region34: #{tpu_custom_call.1} parent=1 // pred_check
      _
    $region35: #{tpu_custom_call.1} parent=1 // pred_check_branch
      %57 = sbr.rel (0) target = $region37
    $region36: #{tpu_custom_call.1} parent=1 // pred_region
      _
    $region37: #{tpu_custom_call.1} parent=1 // pred_fallthru
      _
    // Predicated region
    $region38: #{tpu_custom_call.1} parent=1 // pred_check
      _
    $region39: #{tpu_custom_call.1} parent=1 // pred_check_branch
      %59 = sbr.rel (0) target = $region41
    $region40: #{tpu_custom_call.1} parent=1 // pred_region
      _
    $region41: #{tpu_custom_call.1} parent=1 // pred_fallthru
      _
    // Predicated region
    $region42: #{tpu_custom_call.1} parent=1 // pred_check
      _
    $region43: #{tpu_custom_call.1} parent=1 // pred_check_branch
      %61 = sbr.rel (0) target = $region45
    $region44: #{tpu_custom_call.1} parent=1 // pred_region
      _
    $region45: #{tpu_custom_call.1} parent=1 // pred_fallthru
      _
    // Predicated region
    $region46: #{tpu_custom_call.1} parent=1 // pred_check
      _
    $region47: #{tpu_custom_call.1} parent=1 // pred_check_branch
      %63 = sbr.rel (0) target = $region49
    $region48: #{tpu_custom_call.1} parent=1 // pred_region
      _
    $region49: #{tpu_custom_call.1} parent=1 // pred_fallthru
      _
    // Predicated region
    $region50: #{tpu_custom_call.1} parent=1 // pred_check
      _
    $region51: #{tpu_custom_call.1} parent=1 // pred_check_branch
      %65 = sbr.rel (0) target = $region53
    $region52: #{tpu_custom_call.1} parent=1 // pred_region
      %66 = dma.done [#allocation4], 6144
    $region53: #{tpu_custom_call.1} parent=1 // pred_fallthru
      _
    // Predicated region
    $region54: #{tpu_custom_call.1} parent=1 // pred_check
      _
    $region55: #{tpu_custom_call.1} parent=1 // pred_check_branch
      %68 = sbr.rel (0) target = $region57
    $region56: #{tpu_custom_call.1} parent=1 // pred_region
      %69 = dma.done [#allocation7], 8192
    $region57: #{tpu_custom_call.1} parent=1 // pred_fallthru
      _
    %v71 = vld [vmem:[%s2] sm:$0xff]
    %v72 = vld [vmem:[%s2 + $0x8] sm:$0xff]
    %v73 = vld [vmem:[%s2 + $0x10] sm:$0x33]
    %v74 = vld [vmem:[%s0] sm:$0xf]
    %v75 = vld [vmem:[%s0 + $0x4] sm:$0xf]
    %v78 = vunpack.c.l.b16 %v74
    %v79 = vunpack.c.l.b16 %v75
    %v80 = vpack.c.b16 %v79, %v78
    %v84 = vunpack.c.l.b16 %v71
    %v85 = vunpack.c.h.b16 %v71
    %v86 = vunpack.c.l.b16 %v72
    %v87 = vunpack.c.h.b16 %v72
    %v88 = vunpack.c.l.b16 %v73
    %v89 = vunpack.c.h.b16 %v73
    %v90 = vpack.c.b16 %v86, %v84
    %v91 = vpack.c.b16 %v87, %v85
    %v92 = vpack.c.b16 %v88, %v88
    %v93 = vpack.c.b16 %v89, %v89
    %vm96 = vcmask 162816
    %v98 = vsel %vm96, %v80, 0
    %vm100 = vcmask 1041408
    %v102 = vsel %vm100, %v92, 0
    %v105 = vsel %vm100, %v93, 0
    %107 = vmatprep.subr.bf16.mxu0 %v91
    %108 = vmatpush1.bf16.msra.mxu0 %v90
    %109 = vmatprep.subr.bf16.mxu0 %v105
    %110 = vmatpush1.bf16.msra.mxu0 %v102
    %111 = vmatprep.subr.bf16.mxu0 0
    %112 = vmatpush1.bf16.msra.mxu0 0
    %113 = vmatprep.subr.bf16.mxu0 0
    %114 = vmatpush1.bf16.msra.mxu0 0
    %115 = vmatprep.subr.bf16.mxu0 0
    %116 = vmatpush1.bf16.msra.mxu0 0
    %117 = vmatprep.subr.bf16.mxu0 0
    %118 = vmatpush1.bf16.msra.mxu0 0
    %119 = vmatprep.subr.bf16.mxu0 0
    %120 = vmatpush1.bf16.msra.mxu0 0
    %121 = vmatprep.subr.bf16.mxu0 0
    %122 = vmatpush1.bf16.msra.mxu0 0
    %123 = vmatprep.subr.bf16.mxu0 0
    %124 = vmatpush1.bf16.msra.mxu0 0
    %125 = vmatprep.subr.bf16.mxu0 0
    %126 = vmatpush1.bf16.msra.mxu0 0
    %127 = vmatprep.subr.bf16.mxu0 0
    %128 = vmatpush1.bf16.msra.mxu0 0
    %129 = vmatprep.subr.bf16.mxu0 0
    %130 = vmatpush1.bf16.msra.mxu0 0
    %131 = vmatprep.subr.bf16.mxu0 0
    %132 = vmatpush1.bf16.msra.mxu0 0
    %133 = vmatprep.subr.bf16.mxu0 0
    %134 = vmatpush1.bf16.msra.mxu0 0
    %135 = vmatprep.subr.bf16.mxu0 0
    %136 = vmatpush1.bf16.msra.mxu0 0
    %137 = vmatprep.subr.bf16.mxu0 0
    %138 = vmatpush1.bf16.msra.mxu0 0
    %139 = vmatprep.mubr.bf16.mxu0 0
    %140 = vmatmul.mubr.bf16.gmra.mrb[0].mxu0 %v98
    %v141 = vpop.f32.mrb[0].mxu0
    %v142 = vadd.f32 0.0, %v141
    %v143 = vpop.f32.mrb[0].mxu0
    %v144 = vadd.f32 0.0, %v143
    %v145 = vpop.f32.mrb[0].mxu0
    %v146 = vadd.f32 0.0, %v145
    %v147 = vpop.f32.mrb[0].mxu0
    %v148 = vadd.f32 0.0, %v147
    %149 = vdwg.mxu0
    %v150 = vld [vmem:[%s1] sm:$0xf]
    %v151 = vld [vmem:[%s1 + $0x4] sm:$0xf]
    %v154 = vunpack.c.l.b16 %v150
    %v155 = vunpack.c.l.b16 %v151
    %v156 = vpack.c.b16 %v155, %v154
    %v158 = vsel %vm96, %v156, 0
    %160 = vmatprep.subr.bf16.mxu0 %v91
    %161 = vmatpush1.bf16.msra.mxu0 %v90
    %162 = vmatprep.subr.bf16.mxu0 %v105
    %163 = vmatpush1.bf16.msra.mxu0 %v102
    %164 = vmatprep.subr.bf16.mxu0 0
    %165 = vmatpush1.bf16.msra.mxu0 0
    %166 = vmatprep.subr.bf16.mxu0 0
    %167 = vmatpush1.bf16.msra.mxu0 0
    %168 = vmatprep.subr.bf16.mxu0 0
    %169 = vmatpush1.bf16.msra.mxu0 0
    %170 = vmatprep.subr.bf16.mxu0 0
    %171 = vmatpush1.bf16.msra.mxu0 0
    %172 = vmatprep.subr.bf16.mxu0 0
    %173 = vmatpush1.bf16.msra.mxu0 0
    %174 = vmatprep.subr.bf16.mxu0 0
    %175 = vmatpush1.bf16.msra.mxu0 0
    %176 = vmatprep.subr.bf16.mxu0 0
    %177 = vmatpush1.bf16.msra.mxu0 0
    %178 = vmatprep.subr.bf16.mxu0 0
    %179 = vmatpush1.bf16.msra.mxu0 0
    %180 = vmatprep.subr.bf16.mxu0 0
    %181 = vmatpush1.bf16.msra.mxu0 0
    %182 = vmatprep.subr.bf16.mxu0 0
    %183 = vmatpush1.bf16.msra.mxu0 0
    %184 = vmatprep.subr.bf16.mxu0 0
    %185 = vmatpush1.bf16.msra.mxu0 0
    %186 = vmatprep.subr.bf16.mxu0 0
    %187 = vmatpush1.bf16.msra.mxu0 0
    %188 = vmatprep.subr.bf16.mxu0 0
    %189 = vmatpush1.bf16.msra.mxu0 0
    %190 = vmatprep.subr.bf16.mxu0 0
    %191 = vmatpush1.bf16.msra.mxu0 0
    %192 = vmatprep.mubr.bf16.mxu0 0
    %193 = vmatmul.mubr.bf16.gmra.mrb[0].mxu0 %v158
    %v194 = vpop.f32.mrb[0].mxu0
    %v195 = vadd.f32 0.0, %v194
    %v196 = vpop.f32.mrb[0].mxu0
    %v197 = vadd.f32 0.0, %v196
    %v198 = vpop.f32.mrb[0].mxu0
    %v199 = vadd.f32 0.0, %v198
    %v200 = vpop.f32.mrb[0].mxu0
    %v201 = vadd.f32 0.0, %v200
    %202 = vdwg.mxu0
    %v203 = vmax.f32 %v142, %v195
    %v204 = vmax.f32 %v144, %v197
    %v205 = vmax.f32 %v146, %v199
    %v206 = vmax.f32 %v148, %v201
    %v207 = vld [vmem:[%s3] sm:$0x3]
    %v209 = vlaneseq
    %v210 = vshrl.u32 %v209, 7
    %v211 = vsub.s32 0, %v210
    %v212 = vrot.slane %v207, %v211
    %v213 = vlaneseq
    %v214 = vshrl.u32 %v213, 7
    %v215 = vsub.s32 1, %v214
    %v216 = vrot.slane %v207, %v215
    %v219 = vadd.f32 %v203, %v212
    %v220 = vadd.f32 %v204, %v216
    %v221 = vadd.f32 %v205, %v212
    %v222 = vadd.f32 %v206, %v216
    %v223 = vmax.f32 %v219, 0.0
    %v224 = vmax.f32 %v220, 0.0
    %v225 = vmax.f32 %v221, 0.0
    %v226 = vmax.f32 %v222, 0.0
    %v227 = vlaneseq
    %v228 = vshrl.u32 %v227, 7
    %v229 = vadd.s32 %v228, 8
    %vm230 = vcmp.lt.s32.totalorder %v228, 2
    %vm231 = vcmp.lt.s32.totalorder %v229, 2
    %v232 = vrot.slane %v223, 6
    %v233 = vrot.slane %v224, 6
    %v234 = vrot.slane %v225, 6
    %v235 = vrot.slane %v226, 6
    %v236 = vsel %vm230, %v232, %v234
    %v237 = vsel %vm230, %v233, %v235
    %v238 = vsel %vm230, %v234, %v232
    %v239 = vsel %vm230, %v235, %v233
    %v240 = vsel %vm230, 0.0, %v238
    %v241 = vsel %vm230, 0.0, %v239
    %v242 = vsel %vm231, 0.0, %v236
    %v243 = vsel %vm231, 0.0, %v237
    %vm244 = vcmp.ge.s32.totalorder %v228, 14
    %vm245 = vcmp.ge.s32.totalorder %v229, 14
    %v246 = vrot.slane %v223, 2
    %v247 = vrot.slane %v224, 2
    %v248 = vrot.slane %v225, 2
    %v249 = vrot.slane %v226, 2
    %vm250 = vcmp.lt.s32.totalorder %v228, 6
    %v251 = vsel %vm250, %v246, %v248
    %v252 = vsel %vm250, %v247, %v249
    %v253 = vsel %vm250, %v248, %v246
    %v254 = vsel %vm250, %v249, %v247
    %v255 = vsel %vm244, 0.0, %v251
    %v256 = vsel %vm244, 0.0, %v252
    %v257 = vsel %vm245, 0.0, %v253
    %v258 = vsel %vm245, 0.0, %v254
    %v259 = vpack.c.bf16 %v242, %v240
    %v260 = vpack.c.bf16 %v243, %v241
    %v261 = vld [vmem:[#allocation3] sm:$0xf]
    %v262 = vld [vmem:[#allocation3 + $0x4] sm:$0xf]
    %v263 = vld [vmem:[#allocation3 + $0x8] sm:$0xf]
    %v264 = vld [vmem:[#allocation3 + $0xc] sm:$0xf]
    %v265 = vld [vmem:[#allocation3 + $0x10] sm:$0xf]
    %v266 = vld [vmem:[#allocation3 + $0x14] sm:$0xf]
    %v267 = vld [vmem:[#allocation3 + $0x18] sm:$0xf]
    %v268 = vld [vmem:[#allocation3 + $0x1c] sm:$0xf]
    %v269 = vld [vmem:[#allocation3 + $0x20] sm:$0xf]
    %v270 = vld [vmem:[#allocation3 + $0x24] sm:$0xf]
    %v271 = vld [vmem:[#allocation3 + $0x28] sm:$0xf]
    %v272 = vld [vmem:[#allocation3 + $0x2c] sm:$0xf]
    %v273 = vld [vmem:[#allocation3 + $0x30] sm:$0xf]
    %v274 = vld [vmem:[#allocation3 + $0x34] sm:$0xf]
    %v275 = vld [vmem:[#allocation3 + $0x38] sm:$0xf]
    %v276 = vld [vmem:[#allocation3 + $0x3c] sm:$0xf]
    %v277 = vld [vmem:[#allocation3 + $0x40] sm:$0xf]
    %v278 = vld [vmem:[#allocation3 + $0x44] sm:$0xf]
    %v279 = vld [vmem:[#allocation3 + $0x48] sm:$0xf]
    %v280 = vld [vmem:[#allocation3 + $0x4c] sm:$0xf]
    %v281 = vld [vmem:[#allocation3 + $0x50] sm:$0xf]
    %v282 = vld [vmem:[#allocation3 + $0x54] sm:$0xf]
    %v283 = vld [vmem:[#allocation3 + $0x58] sm:$0xf]
    %v284 = vld [vmem:[#allocation3 + $0x5c] sm:$0xf]
    %v285 = vld [vmem:[#allocation3 + $0x60] sm:$0xf]
    %v286 = vld [vmem:[#allocation3 + $0x64] sm:$0xf]
    %v287 = vld [vmem:[#allocation3 + $0x68] sm:$0xf]
    %v288 = vld [vmem:[#allocation3 + $0x6c] sm:$0xf]
    %v289 = vld [vmem:[#allocation3 + $0x70] sm:$0xf]
    %v290 = vld [vmem:[#allocation3 + $0x74] sm:$0xf]
    %v291 = vld [vmem:[#allocation3 + $0x78] sm:$0xf]
    %v292 = vld [vmem:[#allocation3 + $0x7c] sm:$0xf]
    %v293 = vpack.c.bf16 %v225, %v223
    %v294 = vpack.c.bf16 %v226, %v224
    %s295 = scalar_lea.vmem [#allocation3], 128
    %v296 = vld [vmem:[%s295] sm:$0xf]
    %v297 = vld [vmem:[%s295 + $0x4] sm:$0xf]
    %v298 = vld [vmem:[%s295 + $0x8] sm:$0xf]
    %v299 = vld [vmem:[%s295 + $0xc] sm:$0xf]
    %v300 = vld [vmem:[%s295 + $0x10] sm:$0xf]
    %v301 = vld [vmem:[%s295 + $0x14] sm:$0xf]
    %v302 = vld [vmem:[%s295 + $0x18] sm:$0xf]
    %v303 = vld [vmem:[%s295 + $0x1c] sm:$0xf]
    %v304 = vld [vmem:[%s295 + $0x20] sm:$0xf]
    %v305 = vld [vmem:[%s295 + $0x24] sm:$0xf]
    %v306 = vld [vmem:[%s295 + $0x28] sm:$0xf]
    %v307 = vld [vmem:[%s295 + $0x2c] sm:$0xf]
    %v308 = vld [vmem:[%s295 + $0x30] sm:$0xf]
    %v309 = vld [vmem:[%s295 + $0x34] sm:$0xf]
    %v310 = vld [vmem:[%s295 + $0x38] sm:$0xf]
    %v311 = vld [vmem:[%s295 + $0x3c] sm:$0xf]
    %v312 = vld [vmem:[%s295 + $0x40] sm:$0xf]
    %v313 = vld [vmem:[%s295 + $0x44] sm:$0xf]
    %v314 = vld [vmem:[%s295 + $0x48] sm:$0xf]
    %v315 = vld [vmem:[%s295 + $0x4c] sm:$0xf]
    %v316 = vld [vmem:[%s295 + $0x50] sm:$0xf]
    %v317 = vld [vmem:[%s295 + $0x54] sm:$0xf]
    %v318 = vld [vmem:[%s295 + $0x58] sm:$0xf]
    %v319 = vld [vmem:[%s295 + $0x5c] sm:$0xf]
    %v320 = vld [vmem:[%s295 + $0x60] sm:$0xf]
    %v321 = vld [vmem:[%s295 + $0x64] sm:$0xf]
    %v322 = vld [vmem:[%s295 + $0x68] sm:$0xf]
    %v323 = vld [vmem:[%s295 + $0x6c] sm:$0xf]
    %v324 = vld [vmem:[%s295 + $0x70] sm:$0xf]
    %v325 = vld [vmem:[%s295 + $0x74] sm:$0xf]
    %v326 = vld [vmem:[%s295 + $0x78] sm:$0xf]
    %v327 = vld [vmem:[%s295 + $0x7c] sm:$0xf]
    %v360 = vunpack.c.l.b16 %v296
    %v361 = vunpack.c.l.b16 %v297
    %v362 = vunpack.c.l.b16 %v298
    %v363 = vunpack.c.l.b16 %v299
    %v364 = vunpack.c.l.b16 %v300
    %v365 = vunpack.c.l.b16 %v301
    %v366 = vunpack.c.l.b16 %v302
    %v367 = vunpack.c.l.b16 %v303
    %v368 = vunpack.c.l.b16 %v304
    %v369 = vunpack.c.l.b16 %v305
    %v370 = vunpack.c.l.b16 %v306
    %v371 = vunpack.c.l.b16 %v307
    %v372 = vunpack.c.l.b16 %v308
    %v373 = vunpack.c.l.b16 %v309
    %v374 = vunpack.c.l.b16 %v310
    %v375 = vunpack.c.l.b16 %v311
    %v376 = vunpack.c.l.b16 %v312
    %v377 = vunpack.c.l.b16 %v313
    %v378 = vunpack.c.l.b16 %v314
    %v379 = vunpack.c.l.b16 %v315
    %v380 = vunpack.c.l.b16 %v316
    %v381 = vunpack.c.l.b16 %v317
    %v382 = vunpack.c.l.b16 %v318
    %v383 = vunpack.c.l.b16 %v319
    %v384 = vunpack.c.l.b16 %v320
    %v385 = vunpack.c.l.b16 %v321
    %v386 = vunpack.c.l.b16 %v322
    %v387 = vunpack.c.l.b16 %v323
    %v388 = vunpack.c.l.b16 %v324
    %v389 = vunpack.c.l.b16 %v325
    %v390 = vunpack.c.l.b16 %v326
    %v391 = vunpack.c.l.b16 %v327
    %v392 = vpack.c.b16 %v361, %v360
    %v393 = vpack.c.b16 %v363, %v362
    %v394 = vpack.c.b16 %v365, %v364
    %v395 = vpack.c.b16 %v367, %v366
    %v396 = vpack.c.b16 %v369, %v368
    %v397 = vpack.c.b16 %v371, %v370
    %v398 = vpack.c.b16 %v373, %v372
    %v399 = vpack.c.b16 %v375, %v374
    %v400 = vpack.c.b16 %v377, %v376
    %v401 = vpack.c.b16 %v379, %v378
    %v402 = vpack.c.b16 %v381, %v380
    %v403 = vpack.c.b16 %v383, %v382
    %v404 = vpack.c.b16 %v385, %v384
    %v405 = vpack.c.b16 %v387, %v386
    %v406 = vpack.c.b16 %v389, %v388
    %v407 = vpack.c.b16 %v391, %v390
    %424 = vmatprep.subr.bf16.mxu0 0
    %425 = vmatpush1.bf16.msra.mxu0 %v392
    %426 = vmatprep.subr.bf16.mxu0 0
    %427 = vmatpush1.bf16.msra.mxu0 %v393
    %428 = vmatprep.subr.bf16.mxu0 0
    %429 = vmatpush1.bf16.msra.mxu0 %v394
    %430 = vmatprep.subr.bf16.mxu0 0
    %431 = vmatpush1.bf16.msra.mxu0 %v395
    %432 = vmatprep.subr.bf16.mxu0 0
    %433 = vmatpush1.bf16.msra.mxu0 %v396
    %434 = vmatprep.subr.bf16.mxu0 0
    %435 = vmatpush1.bf16.msra.mxu0 %v397
    %436 = vmatprep.subr.bf16.mxu0 0
    %437 = vmatpush1.bf16.msra.mxu0 %v398
    %438 = vmatprep.subr.bf16.mxu0 0
    %439 = vmatpush1.bf16.msra.mxu0 %v399
    %440 = vmatprep.subr.bf16.mxu0 0
    %441 = vmatpush1.bf16.msra.mxu0 %v400
    %442 = vmatprep.subr.bf16.mxu0 0
    %443 = vmatpush1.bf16.msra.mxu0 %v401
    %444 = vmatprep.subr.bf16.mxu0 0
    %445 = vmatpush1.bf16.msra.mxu0 %v402
    %446 = vmatprep.subr.bf16.mxu0 0
    %447 = vmatpush1.bf16.msra.mxu0 %v403
    %448 = vmatprep.subr.bf16.mxu0 0
    %449 = vmatpush1.bf16.msra.mxu0 %v404
    %450 = vmatprep.subr.bf16.mxu0 0
    %451 = vmatpush1.bf16.msra.mxu0 %v405
    %452 = vmatprep.subr.bf16.mxu0 0
    %453 = vmatpush1.bf16.msra.mxu0 %v406
    %454 = vmatprep.subr.bf16.mxu0 0
    %455 = vmatpush1.bf16.msra.mxu0 %v407
    %456 = vmatprep.mubr.bf16.mxu0 %v294
    %457 = vmatmul.mubr.bf16.gmra.mrb[0].mxu0 %v293
    %v458 = vpop.f32.mrb[0].mxu0
    %v459 = vadd.f32 0.0, %v458
    %v460 = vpop.f32.mrb[0].mxu0
    %v461 = vpop.f32.mrb[0].mxu0
    %v462 = vadd.f32 0.0, %v461
    %v463 = vpop.f32.mrb[0].mxu0
    %464 = vdwg.mxu0
    %v497 = vunpack.c.l.b16 %v261
    %v498 = vunpack.c.l.b16 %v262
    %v499 = vunpack.c.l.b16 %v263
    %v500 = vunpack.c.l.b16 %v264
    %v501 = vunpack.c.l.b16 %v265
    %v502 = vunpack.c.l.b16 %v266
    %v503 = vunpack.c.l.b16 %v267
    %v504 = vunpack.c.l.b16 %v268
    %v505 = vunpack.c.l.b16 %v269
    %v506 = vunpack.c.l.b16 %v270
    %v507 = vunpack.c.l.b16 %v271
    %v508 = vunpack.c.l.b16 %v272
    %v509 = vunpack.c.l.b16 %v273
    %v510 = vunpack.c.l.b16 %v274
    %v511 = vunpack.c.l.b16 %v275
    %v512 = vunpack.c.l.b16 %v276
    %v513 = vunpack.c.l.b16 %v277
    %v514 = vunpack.c.l.b16 %v278
    %v515 = vunpack.c.l.b16 %v279
    %v516 = vunpack.c.l.b16 %v280
    %v517 = vunpack.c.l.b16 %v281
    %v518 = vunpack.c.l.b16 %v282
    %v519 = vunpack.c.l.b16 %v283
    %v520 = vunpack.c.l.b16 %v284
    %v521 = vunpack.c.l.b16 %v285
    %v522 = vunpack.c.l.b16 %v286
    %v523 = vunpack.c.l.b16 %v287
    %v524 = vunpack.c.l.b16 %v288
    %v525 = vunpack.c.l.b16 %v289
    %v526 = vunpack.c.l.b16 %v290
    %v527 = vunpack.c.l.b16 %v291
    %v528 = vunpack.c.l.b16 %v292
    %v529 = vpack.c.b16 %v498, %v497
    %v530 = vpack.c.b16 %v500, %v499
    %v531 = vpack.c.b16 %v502, %v501
    %v532 = vpack.c.b16 %v504, %v503
    %v533 = vpack.c.b16 %v506, %v505
    %v534 = vpack.c.b16 %v508, %v507
    %v535 = vpack.c.b16 %v510, %v509
    %v536 = vpack.c.b16 %v512, %v511
    %v537 = vpack.c.b16 %v514, %v513
    %v538 = vpack.c.b16 %v516, %v515
    %v539 = vpack.c.b16 %v518, %v517
    %v540 = vpack.c.b16 %v520, %v519
    %v541 = vpack.c.b16 %v522, %v521
    %v542 = vpack.c.b16 %v524, %v523
    %v543 = vpack.c.b16 %v526, %v525
    %v544 = vpack.c.b16 %v528, %v527
    %561 = vmatprep.subr.bf16.mxu0 0
    %562 = vmatpush1.bf16.msra.mxu0 %v529
    %563 = vmatprep.subr.bf16.mxu0 0
    %564 = vmatpush1.bf16.msra.mxu0 %v530
    %565 = vmatprep.subr.bf16.mxu0 0
    %566 = vmatpush1.bf16.msra.mxu0 %v531
    %567 = vmatprep.subr.bf16.mxu0 0
    %568 = vmatpush1.bf16.msra.mxu0 %v532
    %569 = vmatprep.subr.bf16.mxu0 0
    %570 = vmatpush1.bf16.msra.mxu0 %v533
    %571 = vmatprep.subr.bf16.mxu0 0
    %572 = vmatpush1.bf16.msra.mxu0 %v534
    %573 = vmatprep.subr.bf16.mxu0 0
    %574 = vmatpush1.bf16.msra.mxu0 %v535
    %575 = vmatprep.subr.bf16.mxu0 0
    %576 = vmatpush1.bf16.msra.mxu0 %v536
    %577 = vmatprep.subr.bf16.mxu0 0
    %578 = vmatpush1.bf16.msra.mxu0 %v537
    %579 = vmatprep.subr.bf16.mxu0 0
    %580 = vmatpush1.bf16.msra.mxu0 %v538
    %581 = vmatprep.subr.bf16.mxu0 0
    %582 = vmatpush1.bf16.msra.mxu0 %v539
    %583 = vmatprep.subr.bf16.mxu0 0
    %584 = vmatpush1.bf16.msra.mxu0 %v540
    %585 = vmatprep.subr.bf16.mxu0 0
    %586 = vmatpush1.bf16.msra.mxu0 %v541
    %587 = vmatprep.subr.bf16.mxu0 0
    %588 = vmatpush1.bf16.msra.mxu0 %v542
    %589 = vmatprep.subr.bf16.mxu0 0
    %590 = vmatpush1.bf16.msra.mxu0 %v543
    %591 = vmatprep.subr.bf16.mxu0 0
    %592 = vmatpush1.bf16.msra.mxu0 %v544
    %593 = vmatprep.mubr.bf16.mxu0 %v260
    %594 = vmatmul.mubr.bf16.gmra.mrb[0].mxu0 %v259
    %v595 = vpop.f32.mrb[0].mxu0
    %v596 = vadd.f32 %v459, %v595
    %v597 = vpop.f32.mrb[0].mxu0
    %v598 = vpop.f32.mrb[0].mxu0
    %v599 = vadd.f32 %v462, %v598
    %v600 = vpop.f32.mrb[0].mxu0
    %601 = vdwg.mxu0
    %v602 = vpack.c.bf16 %v257, %v255
    %v603 = vpack.c.bf16 %v258, %v256
    %s604 = scalar_lea.vmem [#allocation3], 256
    %v605 = vld [vmem:[%s604] sm:$0xf]
    %v606 = vld [vmem:[%s604 + $0x4] sm:$0xf]
    %v607 = vld [vmem:[%s604 + $0x8] sm:$0xf]
    %v608 = vld [vmem:[%s604 + $0xc] sm:$0xf]
    %v609 = vld [vmem:[%s604 + $0x10] sm:$0xf]
    %v610 = vld [vmem:[%s604 + $0x14] sm:$0xf]
    %v611 = vld [vmem:[%s604 + $0x18] sm:$0xf]
    %v612 = vld [vmem:[%s604 + $0x1c] sm:$0xf]
    %v613 = vld [vmem:[%s604 + $0x20] sm:$0xf]
    %v614 = vld [vmem:[%s604 + $0x24] sm:$0xf]
    %v615 = vld [vmem:[%s604 + $0x28] sm:$0xf]
    %v616 = vld [vmem:[%s604 + $0x2c] sm:$0xf]
    %v617 = vld [vmem:[%s604 + $0x30] sm:$0xf]
    %v618 = vld [vmem:[%s604 + $0x34] sm:$0xf]
    %v619 = vld [vmem:[%s604 + $0x38] sm:$0xf]
    %v620 = vld [vmem:[%s604 + $0x3c] sm:$0xf]
    %v621 = vld [vmem:[%s604 + $0x40] sm:$0xf]
    %v622 = vld [vmem:[%s604 + $0x44] sm:$0xf]
    %v623 = vld [vmem:[%s604 + $0x48] sm:$0xf]
    %v624 = vld [vmem:[%s604 + $0x4c] sm:$0xf]
    %v625 = vld [vmem:[%s604 + $0x50] sm:$0xf]
    %v626 = vld [vmem:[%s604 + $0x54] sm:$0xf]
    %v627 = vld [vmem:[%s604 + $0x58] sm:$0xf]
    %v628 = vld [vmem:[%s604 + $0x5c] sm:$0xf]
    %v629 = vld [vmem:[%s604 + $0x60] sm:$0xf]
    %v630 = vld [vmem:[%s604 + $0x64] sm:$0xf]
    %v631 = vld [vmem:[%s604 + $0x68] sm:$0xf]
    %v632 = vld [vmem:[%s604 + $0x6c] sm:$0xf]
    %v633 = vld [vmem:[%s604 + $0x70] sm:$0xf]
    %v634 = vld [vmem:[%s604 + $0x74] sm:$0xf]
    %v635 = vld [vmem:[%s604 + $0x78] sm:$0xf]
    %v636 = vld [vmem:[%s604 + $0x7c] sm:$0xf]
    %v669 = vunpack.c.l.b16 %v605
    %v670 = vunpack.c.l.b16 %v606
    %v671 = vunpack.c.l.b16 %v607
    %v672 = vunpack.c.l.b16 %v608
    %v673 = vunpack.c.l.b16 %v609
    %v674 = vunpack.c.l.b16 %v610
    %v675 = vunpack.c.l.b16 %v611
    %v676 = vunpack.c.l.b16 %v612
    %v677 = vunpack.c.l.b16 %v613
    %v678 = vunpack.c.l.b16 %v614
    %v679 = vunpack.c.l.b16 %v615
    %v680 = vunpack.c.l.b16 %v616
    %v681 = vunpack.c.l.b16 %v617
    %v682 = vunpack.c.l.b16 %v618
    %v683 = vunpack.c.l.b16 %v619
    %v684 = vunpack.c.l.b16 %v620
    %v685 = vunpack.c.l.b16 %v621
    %v686 = vunpack.c.l.b16 %v622
    %v687 = vunpack.c.l.b16 %v623
    %v688 = vunpack.c.l.b16 %v624
    %v689 = vunpack.c.l.b16 %v625
    %v690 = vunpack.c.l.b16 %v626
    %v691 = vunpack.c.l.b16 %v627
    %v692 = vunpack.c.l.b16 %v628
    %v693 = vunpack.c.l.b16 %v629
    %v694 = vunpack.c.l.b16 %v630
    %v695 = vunpack.c.l.b16 %v631
    %v696 = vunpack.c.l.b16 %v632
    %v697 = vunpack.c.l.b16 %v633
    %v698 = vunpack.c.l.b16 %v634
    %v699 = vunpack.c.l.b16 %v635
    %v700 = vunpack.c.l.b16 %v636
    %v701 = vpack.c.b16 %v670, %v669
    %v702 = vpack.c.b16 %v672, %v671
    %v703 = vpack.c.b16 %v674, %v673
    %v704 = vpack.c.b16 %v676, %v675
    %v705 = vpack.c.b16 %v678, %v677
    %v706 = vpack.c.b16 %v680, %v679
    %v707 = vpack.c.b16 %v682, %v681
    %v708 = vpack.c.b16 %v684, %v683
    %v709 = vpack.c.b16 %v686, %v685
    %v710 = vpack.c.b16 %v688, %v687
    %v711 = vpack.c.b16 %v690, %v689
    %v712 = vpack.c.b16 %v692, %v691
    %v713 = vpack.c.b16 %v694, %v693
    %v714 = vpack.c.b16 %v696, %v695
    %v715 = vpack.c.b16 %v698, %v697
    %v716 = vpack.c.b16 %v700, %v699
    %733 = vmatprep.subr.bf16.mxu0 0
    %734 = vmatpush1.bf16.msra.mxu0 %v701
    %735 = vmatprep.subr.bf16.mxu0 0
    %736 = vmatpush1.bf16.msra.mxu0 %v702
    %737 = vmatprep.subr.bf16.mxu0 0
    %738 = vmatpush1.bf16.msra.mxu0 %v703
    %739 = vmatprep.subr.bf16.mxu0 0
    %740 = vmatpush1.bf16.msra.mxu0 %v704
    %741 = vmatprep.subr.bf16.mxu0 0
    %742 = vmatpush1.bf16.msra.mxu0 %v705
    %743 = vmatprep.subr.bf16.mxu0 0
    %744 = vmatpush1.bf16.msra.mxu0 %v706
    %745 = vmatprep.subr.bf16.mxu0 0
    %746 = vmatpush1.bf16.msra.mxu0 %v707
    %747 = vmatprep.subr.bf16.mxu0 0
    %748 = vmatpush1.bf16.msra.mxu0 %v708
    %749 = vmatprep.subr.bf16.mxu0 0
    %750 = vmatpush1.bf16.msra.mxu0 %v709
    %751 = vmatprep.subr.bf16.mxu0 0
    %752 = vmatpush1.bf16.msra.mxu0 %v710
    %753 = vmatprep.subr.bf16.mxu0 0
    %754 = vmatpush1.bf16.msra.mxu0 %v711
    %755 = vmatprep.subr.bf16.mxu0 0
    %756 = vmatpush1.bf16.msra.mxu0 %v712
    %757 = vmatprep.subr.bf16.mxu0 0
    %758 = vmatpush1.bf16.msra.mxu0 %v713
    %759 = vmatprep.subr.bf16.mxu0 0
    %760 = vmatpush1.bf16.msra.mxu0 %v714
    %761 = vmatprep.subr.bf16.mxu0 0
    %762 = vmatpush1.bf16.msra.mxu0 %v715
    %763 = vmatprep.subr.bf16.mxu0 0
    %764 = vmatpush1.bf16.msra.mxu0 %v716
    %765 = vmatprep.mubr.bf16.mxu0 %v603
    %766 = vmatmul.mubr.bf16.gmra.mrb[0].mxu0 %v602
    %v767 = vpop.f32.mrb[0].mxu0
    %v768 = vadd.f32 0.0, %v767
    %v769 = vpop.f32.mrb[0].mxu0
    %v770 = vpop.f32.mrb[0].mxu0
    %v771 = vadd.f32 0.0, %v770
    %v772 = vpop.f32.mrb[0].mxu0
    %773 = vdwg.mxu0
    %v774 = vadd.f32 %v596, %v768
    %v775 = vadd.f32 %v599, %v771
    %v776 = vld [vmem:[%s5] sm:$0x1]
    %v778 = vlaneseq
    %v779 = vshrl.u32 %v778, 7
    %v780 = vsub.s32 0, %v779
    %v781 = vrot.slane %v776, %v780
    %v783 = vadd.f32 %v774, %v781
    %v784 = vadd.f32 %v775, %v781
    %v785 = vmax.f32 %v783, 0.0
    %v786 = vmax.f32 %v784, 0.0
    %787 = vst [vmem:[#allocation2] sm:$0xff] %v785
    %788 = vst [vmem:[#allocation2 + $0x8] sm:$0xff] %v786
    %v789 = vld [vmem:[#allocation2] sm:$0x3]
    %v790 = vpack.c.bf16 %v789, %v789
    %v791 = vld [vmem:[#allocation6] sm:$0xf]
    %v792 = vld [vmem:[#allocation6 + $0x4] sm:$0xf]
    %v793 = vld [vmem:[#allocation6 + $0x8] sm:$0xf]
    %v794 = vld [vmem:[#allocation6 + $0xc] sm:$0xf]
    %v795 = vld [vmem:[#allocation6 + $0x10] sm:$0xf]
    %v796 = vld [vmem:[#allocation6 + $0x14] sm:$0xf]
    %v797 = vld [vmem:[#allocation6 + $0x18] sm:$0xf]
    %v798 = vld [vmem:[#allocation6 + $0x1c] sm:$0xf]
    %v799 = vld [vmem:[#allocation6 + $0x20] sm:$0xf]
    %v800 = vld [vmem:[#allocation6 + $0x24] sm:$0xf]
    %v801 = vld [vmem:[#allocation6 + $0x28] sm:$0xf]
    %v802 = vld [vmem:[#allocation6 + $0x2c] sm:$0xf]
    %v803 = vld [vmem:[#allocation6 + $0x30] sm:$0xf]
    %v804 = vld [vmem:[#allocation6 + $0x34] sm:$0xf]
    %v805 = vld [vmem:[#allocation6 + $0x38] sm:$0xf]
    %v806 = vld [vmem:[#allocation6 + $0x3c] sm:$0xf]
    %v807 = vld [vmem:[#allocation2 + $0x2] sm:$0x3]
    %v808 = vpack.c.bf16 %v807, %v807
    %s809 = scalar_lea.vmem [#allocation6], 64
    %v810 = vld [vmem:[%s809] sm:$0xf]
    %v811 = vld [vmem:[%s809 + $0x4] sm:$0xf]
    %v812 = vld [vmem:[%s809 + $0x8] sm:$0xf]
    %v813 = vld [vmem:[%s809 + $0xc] sm:$0xf]
    %v814 = vld [vmem:[%s809 + $0x10] sm:$0xf]
    %v815 = vld [vmem:[%s809 + $0x14] sm:$0xf]
    %v816 = vld [vmem:[%s809 + $0x18] sm:$0xf]
    %v817 = vld [vmem:[%s809 + $0x1c] sm:$0xf]
    %v818 = vld [vmem:[%s809 + $0x20] sm:$0xf]
    %v819 = vld [vmem:[%s809 + $0x24] sm:$0xf]
    %v820 = vld [vmem:[%s809 + $0x28] sm:$0xf]
    %v821 = vld [vmem:[%s809 + $0x2c] sm:$0xf]
    %v822 = vld [vmem:[%s809 + $0x30] sm:$0xf]
    %v823 = vld [vmem:[%s809 + $0x34] sm:$0xf]
    %v824 = vld [vmem:[%s809 + $0x38] sm:$0xf]
    %v825 = vld [vmem:[%s809 + $0x3c] sm:$0xf]
    %v842 = vunpack.c.l.b16 %v810
    %v843 = vunpack.c.l.b16 %v811
    %v844 = vunpack.c.l.b16 %v812
    %v845 = vunpack.c.l.b16 %v813
    %v846 = vunpack.c.l.b16 %v814
    %v847 = vunpack.c.l.b16 %v815
    %v848 = vunpack.c.l.b16 %v816
    %v849 = vunpack.c.l.b16 %v817
    %v850 = vunpack.c.l.b16 %v818
    %v851 = vunpack.c.l.b16 %v819
    %v852 = vunpack.c.l.b16 %v820
    %v853 = vunpack.c.l.b16 %v821
    %v854 = vunpack.c.l.b16 %v822
    %v855 = vunpack.c.l.b16 %v823
    %v856 = vunpack.c.l.b16 %v824
    %v857 = vunpack.c.l.b16 %v825
    %v858 = vpack.c.b16 %v843, %v842
    %v859 = vpack.c.b16 %v845, %v844
    %v860 = vpack.c.b16 %v847, %v846
    %v861 = vpack.c.b16 %v849, %v848
    %v862 = vpack.c.b16 %v851, %v850
    %v863 = vpack.c.b16 %v853, %v852
    %v864 = vpack.c.b16 %v855, %v854
    %v865 = vpack.c.b16 %v857, %v856
    %874 = vmatprep.subr.bf16.mxu0 0
    %875 = vmatpush1.bf16.msra.mxu0 %v858
    %876 = vmatprep.subr.bf16.mxu0 0
    %877 = vmatpush1.bf16.msra.mxu0 %v859
    %878 = vmatprep.subr.bf16.mxu0 0
    %879 = vmatpush1.bf16.msra.mxu0 %v860
    %880 = vmatprep.subr.bf16.mxu0 0
    %881 = vmatpush1.bf16.msra.mxu0 %v861
    %882 = vmatprep.subr.bf16.mxu0 0
    %883 = vmatpush1.bf16.msra.mxu0 %v862
    %884 = vmatprep.subr.bf16.mxu0 0
    %885 = vmatpush1.bf16.msra.mxu0 %v863
    %886 = vmatprep.subr.bf16.mxu0 0
    %887 = vmatpush1.bf16.msra.mxu0 %v864
    %888 = vmatprep.subr.bf16.mxu0 0
    %889 = vmatpush1.bf16.msra.mxu0 %v865
    %890 = vmatprep.subr.bf16.mxu0 0
    %891 = vmatpush1.bf16.msra.mxu0 0
    %892 = vmatprep.subr.bf16.mxu0 0
    %893 = vmatpush1.bf16.msra.mxu0 0
    %894 = vmatprep.subr.bf16.mxu0 0
    %895 = vmatpush1.bf16.msra.mxu0 0
    %896 = vmatprep.subr.bf16.mxu0 0
    %897 = vmatpush1.bf16.msra.mxu0 0
    %898 = vmatprep.subr.bf16.mxu0 0
    %899 = vmatpush1.bf16.msra.mxu0 0
    %900 = vmatprep.subr.bf16.mxu0 0
    %901 = vmatpush1.bf16.msra.mxu0 0
    %902 = vmatprep.subr.bf16.mxu0 0
    %903 = vmatpush1.bf16.msra.mxu0 0
    %904 = vmatprep.subr.bf16.mxu0 0
    %905 = vmatpush1.bf16.msra.mxu0 0
    %906 = vmatprep.mubr.bf16.mxu0 0
    %907 = vmatmul.mubr.bf16.gmra.mrb[0].mxu0 %v808
    %v908 = vpop.f32.mrb[0].mxu0
    %v909 = vadd.f32 0.0, %v908
    %v910 = vpop.f32.mrb[0].mxu0
    %v911 = vpop.f32.mrb[0].mxu0
    %v912 = vpop.f32.mrb[0].mxu0
    %913 = vdwg.mxu0
    %v930 = vunpack.c.l.b16 %v791
    %v931 = vunpack.c.l.b16 %v792
    %v932 = vunpack.c.l.b16 %v793
    %v933 = vunpack.c.l.b16 %v794
    %v934 = vunpack.c.l.b16 %v795
    %v935 = vunpack.c.l.b16 %v796
    %v936 = vunpack.c.l.b16 %v797
    %v937 = vunpack.c.l.b16 %v798
    %v938 = vunpack.c.l.b16 %v799
    %v939 = vunpack.c.l.b16 %v800
    %v940 = vunpack.c.l.b16 %v801
    %v941 = vunpack.c.l.b16 %v802
    %v942 = vunpack.c.l.b16 %v803
    %v943 = vunpack.c.l.b16 %v804
    %v944 = vunpack.c.l.b16 %v805
    %v945 = vunpack.c.l.b16 %v806
    %v946 = vpack.c.b16 %v931, %v930
    %v947 = vpack.c.b16 %v933, %v932
    %v948 = vpack.c.b16 %v935, %v934
    %v949 = vpack.c.b16 %v937, %v936
    %v950 = vpack.c.b16 %v939, %v938
    %v951 = vpack.c.b16 %v941, %v940
    %v952 = vpack.c.b16 %v943, %v942
    %v953 = vpack.c.b16 %v945, %v944
    %962 = vmatprep.subr.bf16.mxu0 0
    %963 = vmatpush1.bf16.msra.mxu0 %v946
    %964 = vmatprep.subr.bf16.mxu0 0
    %965 = vmatpush1.bf16.msra.mxu0 %v947
    %966 = vmatprep.subr.bf16.mxu0 0
    %967 = vmatpush1.bf16.msra.mxu0 %v948
    %968 = vmatprep.subr.bf16.mxu0 0
    %969 = vmatpush1.bf16.msra.mxu0 %v949
    %970 = vmatprep.subr.bf16.mxu0 0
    %971 = vmatpush1.bf16.msra.mxu0 %v950
    %972 = vmatprep.subr.bf16.mxu0 0
    %973 = vmatpush1.bf16.msra.mxu0 %v951
    %974 = vmatprep.subr.bf16.mxu0 0
    %975 = vmatpush1.bf16.msra.mxu0 %v952
    %976 = vmatprep.subr.bf16.mxu0 0
    %977 = vmatpush1.bf16.msra.mxu0 %v953
    %978 = vmatprep.subr.bf16.mxu0 0
    %979 = vmatpush1.bf16.msra.mxu0 0
    %980 = vmatprep.subr.bf16.mxu0 0
    %981 = vmatpush1.bf16.msra.mxu0 0
    %982 = vmatprep.subr.bf16.mxu0 0
    %983 = vmatpush1.bf16.msra.mxu0 0
    %984 = vmatprep.subr.bf16.mxu0 0
    %985 = vmatpush1.bf16.msra.mxu0 0
    %986 = vmatprep.subr.bf16.mxu0 0
    %987 = vmatpush1.bf16.msra.mxu0 0
    %988 = vmatprep.subr.bf16.mxu0 0
    %989 = vmatpush1.bf16.msra.mxu0 0
    %990 = vmatprep.subr.bf16.mxu0 0
    %991 = vmatpush1.bf16.msra.mxu0 0
    %992 = vmatprep.subr.bf16.mxu0 0
    %993 = vmatpush1.bf16.msra.mxu0 0
    %994 = vmatprep.mubr.bf16.mxu0 0
    %995 = vmatmul.mubr.bf16.gmra.mrb[0].mxu0 %v790
    %v996 = vpop.f32.mrb[0].mxu0
    %v997 = vadd.f32 %v909, %v996
    %v998 = vpop.f32.mrb[0].mxu0
    %v999 = vpop.f32.mrb[0].mxu0
    %v1000 = vpop.f32.mrb[0].mxu0
    %1001 = vdwg.mxu0
    %v1002 = vld [vmem:[#allocation2 + $0x4] sm:$0x3]
    %v1003 = vpack.c.bf16 %v1002, %v1002
    %s1004 = scalar_lea.vmem [#allocation6], 128
    %v1005 = vld [vmem:[%s1004] sm:$0xf]
    %v1006 = vld [vmem:[%s1004 + $0x4] sm:$0xf]
    %v1007 = vld [vmem:[%s1004 + $0x8] sm:$0xf]
    %v1008 = vld [vmem:[%s1004 + $0xc] sm:$0xf]
    %v1009 = vld [vmem:[%s1004 + $0x10] sm:$0xf]
    %v1010 = vld [vmem:[%s1004 + $0x14] sm:$0xf]
    %v1011 = vld [vmem:[%s1004 + $0x18] sm:$0xf]
    %v1012 = vld [vmem:[%s1004 + $0x1c] sm:$0xf]
    %v1013 = vld [vmem:[%s1004 + $0x20] sm:$0xf]
    %v1014 = vld [vmem:[%s1004 + $0x24] sm:$0xf]
    %v1015 = vld [vmem:[%s1004 + $0x28] sm:$0xf]
    %v1016 = vld [vmem:[%s1004 + $0x2c] sm:$0xf]
    %v1017 = vld [vmem:[%s1004 + $0x30] sm:$0xf]
    %v1018 = vld [vmem:[%s1004 + $0x34] sm:$0xf]
    %v1019 = vld [vmem:[%s1004 + $0x38] sm:$0xf]
    %v1020 = vld [vmem:[%s1004 + $0x3c] sm:$0xf]
    %v1037 = vunpack.c.l.b16 %v1005
    %v1038 = vunpack.c.l.b16 %v1006
    %v1039 = vunpack.c.l.b16 %v1007
    %v1040 = vunpack.c.l.b16 %v1008
    %v1041 = vunpack.c.l.b16 %v1009
    %v1042 = vunpack.c.l.b16 %v1010
    %v1043 = vunpack.c.l.b16 %v1011
    %v1044 = vunpack.c.l.b16 %v1012
    %v1045 = vunpack.c.l.b16 %v1013
    %v1046 = vunpack.c.l.b16 %v1014
    %v1047 = vunpack.c.l.b16 %v1015
    %v1048 = vunpack.c.l.b16 %v1016
    %v1049 = vunpack.c.l.b16 %v1017
    %v1050 = vunpack.c.l.b16 %v1018
    %v1051 = vunpack.c.l.b16 %v1019
    %v1052 = vunpack.c.l.b16 %v1020
    %v1053 = vpack.c.b16 %v1038, %v1037
    %v1054 = vpack.c.b16 %v1040, %v1039
    %v1055 = vpack.c.b16 %v1042, %v1041
    %v1056 = vpack.c.b16 %v1044, %v1043
    %v1057 = vpack.c.b16 %v1046, %v1045
    %v1058 = vpack.c.b16 %v1048, %v1047
    %v1059 = vpack.c.b16 %v1050, %v1049
    %v1060 = vpack.c.b16 %v1052, %v1051
    %1069 = vmatprep.subr.bf16.mxu0 0
    %1070 = vmatpush1.bf16.msra.mxu0 %v1053
    %1071 = vmatprep.subr.bf16.mxu0 0
    %1072 = vmatpush1.bf16.msra.mxu0 %v1054
    %1073 = vmatprep.subr.bf16.mxu0 0
    %1074 = vmatpush1.bf16.msra.mxu0 %v1055
    %1075 = vmatprep.subr.bf16.mxu0 0
    %1076 = vmatpush1.bf16.msra.mxu0 %v1056
    %1077 = vmatprep.subr.bf16.mxu0 0
    %1078 = vmatpush1.bf16.msra.mxu0 %v1057
    %1079 = vmatprep.subr.bf16.mxu0 0
    %1080 = vmatpush1.bf16.msra.mxu0 %v1058
    %1081 = vmatprep.subr.bf16.mxu0 0
    %1082 = vmatpush1.bf16.msra.mxu0 %v1059
    %1083 = vmatprep.subr.bf16.mxu0 0
    %1084 = vmatpush1.bf16.msra.mxu0 %v1060
    %1085 = vmatprep.subr.bf16.mxu0 0
    %1086 = vmatpush1.bf16.msra.mxu0 0
    %1087 = vmatprep.subr.bf16.mxu0 0
    %1088 = vmatpush1.bf16.msra.mxu0 0
    %1089 = vmatprep.subr.bf16.mxu0 0
    %1090 = vmatpush1.bf16.msra.mxu0 0
    %1091 = vmatprep.subr.bf16.mxu0 0
    %1092 = vmatpush1.bf16.msra.mxu0 0
    %1093 = vmatprep.subr.bf16.mxu0 0
    %1094 = vmatpush1.bf16.msra.mxu0 0
    %1095 = vmatprep.subr.bf16.mxu0 0
    %1096 = vmatpush1.bf16.msra.mxu0 0
    %1097 = vmatprep.subr.bf16.mxu0 0
    %1098 = vmatpush1.bf16.msra.mxu0 0
    %1099 = vmatprep.subr.bf16.mxu0 0
    %1100 = vmatpush1.bf16.msra.mxu0 0
    %1101 = vmatprep.mubr.bf16.mxu0 0
    %1102 = vmatmul.mubr.bf16.gmra.mrb[0].mxu0 %v1003
    %v1103 = vpop.f32.mrb[0].mxu0
    %v1104 = vadd.f32 0.0, %v1103
    %v1105 = vpop.f32.mrb[0].mxu0
    %v1106 = vpop.f32.mrb[0].mxu0
    %v1107 = vpop.f32.mrb[0].mxu0
    %1108 = vdwg.mxu0
    %v1109 = vadd.f32 %v997, %v1104
    %v1110 = vld [vmem:[#allocation2 + $0x6] sm:$0x3]
    %v1111 = vpack.c.bf16 %v1110, %v1110
    %s1112 = scalar_lea.vmem [#allocation6], 192
    %v1113 = vld [vmem:[%s1112] sm:$0xf]
    %v1114 = vld [vmem:[%s1112 + $0x4] sm:$0xf]
    %v1115 = vld [vmem:[%s1112 + $0x8] sm:$0xf]
    %v1116 = vld [vmem:[%s1112 + $0xc] sm:$0xf]
    %v1117 = vld [vmem:[%s1112 + $0x10] sm:$0xf]
    %v1118 = vld [vmem:[%s1112 + $0x14] sm:$0xf]
    %v1119 = vld [vmem:[%s1112 + $0x18] sm:$0xf]
    %v1120 = vld [vmem:[%s1112 + $0x1c] sm:$0xf]
    %v1121 = vld [vmem:[%s1112 + $0x20] sm:$0xf]
    %v1122 = vld [vmem:[%s1112 + $0x24] sm:$0xf]
    %v1123 = vld [vmem:[%s1112 + $0x28] sm:$0xf]
    %v1124 = vld [vmem:[%s1112 + $0x2c] sm:$0xf]
    %v1125 = vld [vmem:[%s1112 + $0x30] sm:$0xf]
    %v1126 = vld [vmem:[%s1112 + $0x34] sm:$0xf]
    %v1127 = vld [vmem:[%s1112 + $0x38] sm:$0xf]
    %v1128 = vld [vmem:[%s1112 + $0x3c] sm:$0xf]
    %v1145 = vunpack.c.l.b16 %v1113
    %v1146 = vunpack.c.l.b16 %v1114
    %v1147 = vunpack.c.l.b16 %v1115
    %v1148 = vunpack.c.l.b16 %v1116
    %v1149 = vunpack.c.l.b16 %v1117
    %v1150 = vunpack.c.l.b16 %v1118
    %v1151 = vunpack.c.l.b16 %v1119
    %v1152 = vunpack.c.l.b16 %v1120
    %v1153 = vunpack.c.l.b16 %v1121
    %v1154 = vunpack.c.l.b16 %v1122
    %v1155 = vunpack.c.l.b16 %v1123
    %v1156 = vunpack.c.l.b16 %v1124
    %v1157 = vunpack.c.l.b16 %v1125
    %v1158 = vunpack.c.l.b16 %v1126
    %v1159 = vunpack.c.l.b16 %v1127
    %v1160 = vunpack.c.l.b16 %v1128
    %v1161 = vpack.c.b16 %v1146, %v1145
    %v1162 = vpack.c.b16 %v1148, %v1147
    %v1163 = vpack.c.b16 %v1150, %v1149
    %v1164 = vpack.c.b16 %v1152, %v1151
    %v1165 = vpack.c.b16 %v1154, %v1153
    %v1166 = vpack.c.b16 %v1156, %v1155
    %v1167 = vpack.c.b16 %v1158, %v1157
    %v1168 = vpack.c.b16 %v1160, %v1159
    %1177 = vmatprep.subr.bf16.mxu0 0
    %1178 = vmatpush1.bf16.msra.mxu0 %v1161
    %1179 = vmatprep.subr.bf16.mxu0 0
    %1180 = vmatpush1.bf16.msra.mxu0 %v1162
    %1181 = vmatprep.subr.bf16.mxu0 0
    %1182 = vmatpush1.bf16.msra.mxu0 %v1163
    %1183 = vmatprep.subr.bf16.mxu0 0
    %1184 = vmatpush1.bf16.msra.mxu0 %v1164
    %1185 = vmatprep.subr.bf16.mxu0 0
    %1186 = vmatpush1.bf16.msra.mxu0 %v1165
    %1187 = vmatprep.subr.bf16.mxu0 0
    %1188 = vmatpush1.bf16.msra.mxu0 %v1166
    %1189 = vmatprep.subr.bf16.mxu0 0
    %1190 = vmatpush1.bf16.msra.mxu0 %v1167
    %1191 = vmatprep.subr.bf16.mxu0 0
    %1192 = vmatpush1.bf16.msra.mxu0 %v1168
    %1193 = vmatprep.subr.bf16.mxu0 0
    %1194 = vmatpush1.bf16.msra.mxu0 0
    %1195 = vmatprep.subr.bf16.mxu0 0
    %1196 = vmatpush1.bf16.msra.mxu0 0
    %1197 = vmatprep.subr.bf16.mxu0 0
    %1198 = vmatpush1.bf16.msra.mxu0 0
    %1199 = vmatprep.subr.bf16.mxu0 0
    %1200 = vmatpush1.bf16.msra.mxu0 0
    %1201 = vmatprep.subr.bf16.mxu0 0
    %1202 = vmatpush1.bf16.msra.mxu0 0
    %1203 = vmatprep.subr.bf16.mxu0 0
    %1204 = vmatpush1.bf16.msra.mxu0 0
    %1205 = vmatprep.subr.bf16.mxu0 0
    %1206 = vmatpush1.bf16.msra.mxu0 0
    %1207 = vmatprep.subr.bf16.mxu0 0
    %1208 = vmatpush1.bf16.msra.mxu0 0
    %1209 = vmatprep.mubr.bf16.mxu0 0
    %1210 = vmatmul.mubr.bf16.gmra.mrb[0].mxu0 %v1111
    %v1211 = vpop.f32.mrb[0].mxu0
    %v1212 = vadd.f32 0.0, %v1211
    %v1213 = vpop.f32.mrb[0].mxu0
    %v1214 = vpop.f32.mrb[0].mxu0
    %v1215 = vpop.f32.mrb[0].mxu0
    %1216 = vdwg.mxu0
    %v1217 = vadd.f32 %v1109, %v1212
    %v1218 = vld [vmem:[#allocation2 + $0x8] sm:$0x3]
    %v1219 = vpack.c.bf16 %v1218, %v1218
    %s1220 = scalar_lea.vmem [#allocation6], 256
    %v1221 = vld [vmem:[%s1220] sm:$0xf]
    %v1222 = vld [vmem:[%s1220 + $0x4] sm:$0xf]
    %v1223 = vld [vmem:[%s1220 + $0x8] sm:$0xf]
    %v1224 = vld [vmem:[%s1220 + $0xc] sm:$0xf]
    %v1225 = vld [vmem:[%s1220 + $0x10] sm:$0xf]
    %v1226 = vld [vmem:[%s1220 + $0x14] sm:$0xf]
    %v1227 = vld [vmem:[%s1220 + $0x18] sm:$0xf]
    %v1228 = vld [vmem:[%s1220 + $0x1c] sm:$0xf]
    %v1229 = vld [vmem:[%s1220 + $0x20] sm:$0xf]
    %v1230 = vld [vmem:[%s1220 + $0x24] sm:$0xf]
    %v1231 = vld [vmem:[%s1220 + $0x28] sm:$0xf]
    %v1232 = vld [vmem:[%s1220 + $0x2c] sm:$0xf]
    %v1233 = vld [vmem:[%s1220 + $0x30] sm:$0xf]
    %v1234 = vld [vmem:[%s1220 + $0x34] sm:$0xf]
    %v1235 = vld [vmem:[%s1220 + $0x38] sm:$0xf]
    %v1236 = vld [vmem:[%s1220 + $0x3c] sm:$0xf]
    %v1253 = vunpack.c.l.b16 %v1221
    %v1254 = vunpack.c.l.b16 %v1222
    %v1255 = vunpack.c.l.b16 %v1223
    %v1256 = vunpack.c.l.b16 %v1224
    %v1257 = vunpack.c.l.b16 %v1225
    %v1258 = vunpack.c.l.b16 %v1226
    %v1259 = vunpack.c.l.b16 %v1227
    %v1260 = vunpack.c.l.b16 %v1228
    %v1261 = vunpack.c.l.b16 %v1229
    %v1262 = vunpack.c.l.b16 %v1230
    %v1263 = vunpack.c.l.b16 %v1231
    %v1264 = vunpack.c.l.b16 %v1232
    %v1265 = vunpack.c.l.b16 %v1233
    %v1266 = vunpack.c.l.b16 %v1234
    %v1267 = vunpack.c.l.b16 %v1235
    %v1268 = vunpack.c.l.b16 %v1236
    %v1269 = vpack.c.b16 %v1254, %v1253
    %v1270 = vpack.c.b16 %v1256, %v1255
    %v1271 = vpack.c.b16 %v1258, %v1257
    %v1272 = vpack.c.b16 %v1260, %v1259
    %v1273 = vpack.c.b16 %v1262, %v1261
    %v1274 = vpack.c.b16 %v1264, %v1263
    %v1275 = vpack.c.b16 %v1266, %v1265
    %v1276 = vpack.c.b16 %v1268, %v1267
    %1285 = vmatprep.subr.bf16.mxu0 0
    %1286 = vmatpush1.bf16.msra.mxu0 %v1269
    %1287 = vmatprep.subr.bf16.mxu0 0
    %1288 = vmatpush1.bf16.msra.mxu0 %v1270
    %1289 = vmatprep.subr.bf16.mxu0 0
    %1290 = vmatpush1.bf16.msra.mxu0 %v1271
    %1291 = vmatprep.subr.bf16.mxu0 0
    %1292 = vmatpush1.bf16.msra.mxu0 %v1272
    %1293 = vmatprep.subr.bf16.mxu0 0
    %1294 = vmatpush1.bf16.msra.mxu0 %v1273
    %1295 = vmatprep.subr.bf16.mxu0 0
    %1296 = vmatpush1.bf16.msra.mxu0 %v1274
    %1297 = vmatprep.subr.bf16.mxu0 0
    %1298 = vmatpush1.bf16.msra.mxu0 %v1275
    %1299 = vmatprep.subr.bf16.mxu0 0
    %1300 = vmatpush1.bf16.msra.mxu0 %v1276
    %1301 = vmatprep.subr.bf16.mxu0 0
    %1302 = vmatpush1.bf16.msra.mxu0 0
    %1303 = vmatprep.subr.bf16.mxu0 0
    %1304 = vmatpush1.bf16.msra.mxu0 0
    %1305 = vmatprep.subr.bf16.mxu0 0
    %1306 = vmatpush1.bf16.msra.mxu0 0
    %1307 = vmatprep.subr.bf16.mxu0 0
    %1308 = vmatpush1.bf16.msra.mxu0 0
    %1309 = vmatprep.subr.bf16.mxu0 0
    %1310 = vmatpush1.bf16.msra.mxu0 0
    %1311 = vmatprep.subr.bf16.mxu0 0
    %1312 = vmatpush1.bf16.msra.mxu0 0
    %1313 = vmatprep.subr.bf16.mxu0 0
    %1314 = vmatpush1.bf16.msra.mxu0 0
    %1315 = vmatprep.subr.bf16.mxu0 0
    %1316 = vmatpush1.bf16.msra.mxu0 0
    %1317 = vmatprep.mubr.bf16.mxu0 0
    %1318 = vmatmul.mubr.bf16.gmra.mrb[0].mxu0 %v1219
    %v1319 = vpop.f32.mrb[0].mxu0
    %v1320 = vadd.f32 0.0, %v1319
    %v1321 = vpop.f32.mrb[0].mxu0
    %v1322 = vpop.f32.mrb[0].mxu0
    %v1323 = vpop.f32.mrb[0].mxu0
    %1324 = vdwg.mxu0
    %v1325 = vadd.f32 %v1217, %v1320
    %v1326 = vld [vmem:[#allocation2 + $0xa] sm:$0x3]
    %v1327 = vpack.c.bf16 %v1326, %v1326
    %s1328 = scalar_lea.vmem [#allocation6], 320
    %v1329 = vld [vmem:[%s1328] sm:$0xf]
    %v1330 = vld [vmem:[%s1328 + $0x4] sm:$0xf]
    %v1331 = vld [vmem:[%s1328 + $0x8] sm:$0xf]
    %v1332 = vld [vmem:[%s1328 + $0xc] sm:$0xf]
    %v1333 = vld [vmem:[%s1328 + $0x10] sm:$0xf]
    %v1334 = vld [vmem:[%s1328 + $0x14] sm:$0xf]
    %v1335 = vld [vmem:[%s1328 + $0x18] sm:$0xf]
    %v1336 = vld [vmem:[%s1328 + $0x1c] sm:$0xf]
    %v1337 = vld [vmem:[%s1328 + $0x20] sm:$0xf]
    %v1338 = vld [vmem:[%s1328 + $0x24] sm:$0xf]
    %v1339 = vld [vmem:[%s1328 + $0x28] sm:$0xf]
    %v1340 = vld [vmem:[%s1328 + $0x2c] sm:$0xf]
    %v1341 = vld [vmem:[%s1328 + $0x30] sm:$0xf]
    %v1342 = vld [vmem:[%s1328 + $0x34] sm:$0xf]
    %v1343 = vld [vmem:[%s1328 + $0x38] sm:$0xf]
    %v1344 = vld [vmem:[%s1328 + $0x3c] sm:$0xf]
    %v1361 = vunpack.c.l.b16 %v1329
    %v1362 = vunpack.c.l.b16 %v1330
    %v1363 = vunpack.c.l.b16 %v1331
    %v1364 = vunpack.c.l.b16 %v1332
    %v1365 = vunpack.c.l.b16 %v1333
    %v1366 = vunpack.c.l.b16 %v1334
    %v1367 = vunpack.c.l.b16 %v1335
    %v1368 = vunpack.c.l.b16 %v1336
    %v1369 = vunpack.c.l.b16 %v1337
    %v1370 = vunpack.c.l.b16 %v1338
    %v1371 = vunpack.c.l.b16 %v1339
    %v1372 = vunpack.c.l.b16 %v1340
    %v1373 = vunpack.c.l.b16 %v1341
    %v1374 = vunpack.c.l.b16 %v1342
    %v1375 = vunpack.c.l.b16 %v1343
    %v1376 = vunpack.c.l.b16 %v1344
    %v1377 = vpack.c.b16 %v1362, %v1361
    %v1378 = vpack.c.b16 %v1364, %v1363
    %v1379 = vpack.c.b16 %v1366, %v1365
    %v1380 = vpack.c.b16 %v1368, %v1367
    %v1381 = vpack.c.b16 %v1370, %v1369
    %v1382 = vpack.c.b16 %v1372, %v1371
    %v1383 = vpack.c.b16 %v1374, %v1373
    %v1384 = vpack.c.b16 %v1376, %v1375
    %1393 = vmatprep.subr.bf16.mxu0 0
    %1394 = vmatpush1.bf16.msra.mxu0 %v1377
    %1395 = vmatprep.subr.bf16.mxu0 0
    %1396 = vmatpush1.bf16.msra.mxu0 %v1378
    %1397 = vmatprep.subr.bf16.mxu0 0
    %1398 = vmatpush1.bf16.msra.mxu0 %v1379
    %1399 = vmatprep.subr.bf16.mxu0 0
    %1400 = vmatpush1.bf16.msra.mxu0 %v1380
    %1401 = vmatprep.subr.bf16.mxu0 0
    %1402 = vmatpush1.bf16.msra.mxu0 %v1381
    %1403 = vmatprep.subr.bf16.mxu0 0
    %1404 = vmatpush1.bf16.msra.mxu0 %v1382
    %1405 = vmatprep.subr.bf16.mxu0 0
    %1406 = vmatpush1.bf16.msra.mxu0 %v1383
    %1407 = vmatprep.subr.bf16.mxu0 0
    %1408 = vmatpush1.bf16.msra.mxu0 %v1384
    %1409 = vmatprep.subr.bf16.mxu0 0
    %1410 = vmatpush1.bf16.msra.mxu0 0
    %1411 = vmatprep.subr.bf16.mxu0 0
    %1412 = vmatpush1.bf16.msra.mxu0 0
    %1413 = vmatprep.subr.bf16.mxu0 0
    %1414 = vmatpush1.bf16.msra.mxu0 0
    %1415 = vmatprep.subr.bf16.mxu0 0
    %1416 = vmatpush1.bf16.msra.mxu0 0
    %1417 = vmatprep.subr.bf16.mxu0 0
    %1418 = vmatpush1.bf16.msra.mxu0 0
    %1419 = vmatprep.subr.bf16.mxu0 0
    %1420 = vmatpush1.bf16.msra.mxu0 0
    %1421 = vmatprep.subr.bf16.mxu0 0
    %1422 = vmatpush1.bf16.msra.mxu0 0
    %1423 = vmatprep.subr.bf16.mxu0 0
    %1424 = vmatpush1.bf16.msra.mxu0 0
    %1425 = vmatprep.mubr.bf16.mxu0 0
    %1426 = vmatmul.mubr.bf16.gmra.mrb[0].mxu0 %v1327
    %v1427 = vpop.f32.mrb[0].mxu0
    %v1428 = vadd.f32 0.0, %v1427
    %v1429 = vpop.f32.mrb[0].mxu0
    %v1430 = vpop.f32.mrb[0].mxu0
    %v1431 = vpop.f32.mrb[0].mxu0
    %1432 = vdwg.mxu0
    %v1433 = vadd.f32 %v1325, %v1428
    %v1434 = vld [vmem:[#allocation2 + $0xc] sm:$0x3]
    %v1435 = vpack.c.bf16 %v1434, %v1434
    %s1436 = scalar_lea.vmem [#allocation6], 384
    %v1437 = vld [vmem:[%s1436] sm:$0xf]
    %v1438 = vld [vmem:[%s1436 + $0x4] sm:$0xf]
    %v1439 = vld [vmem:[%s1436 + $0x8] sm:$0xf]
    %v1440 = vld [vmem:[%s1436 + $0xc] sm:$0xf]
    %v1441 = vld [vmem:[%s1436 + $0x10] sm:$0xf]
    %v1442 = vld [vmem:[%s1436 + $0x14] sm:$0xf]
    %v1443 = vld [vmem:[%s1436 + $0x18] sm:$0xf]
    %v1444 = vld [vmem:[%s1436 + $0x1c] sm:$0xf]
    %v1445 = vld [vmem:[%s1436 + $0x20] sm:$0xf]
    %v1446 = vld [vmem:[%s1436 + $0x24] sm:$0xf]
    %v1447 = vld [vmem:[%s1436 + $0x28] sm:$0xf]
    %v1448 = vld [vmem:[%s1436 + $0x2c] sm:$0xf]
    %v1449 = vld [vmem:[%s1436 + $0x30] sm:$0xf]
    %v1450 = vld [vmem:[%s1436 + $0x34] sm:$0xf]
    %v1451 = vld [vmem:[%s1436 + $0x38] sm:$0xf]
    %v1452 = vld [vmem:[%s1436 + $0x3c] sm:$0xf]
    %v1469 = vunpack.c.l.b16 %v1437
    %v1470 = vunpack.c.l.b16 %v1438
    %v1471 = vunpack.c.l.b16 %v1439
    %v1472 = vunpack.c.l.b16 %v1440
    %v1473 = vunpack.c.l.b16 %v1441
    %v1474 = vunpack.c.l.b16 %v1442
    %v1475 = vunpack.c.l.b16 %v1443
    %v1476 = vunpack.c.l.b16 %v1444
    %v1477 = vunpack.c.l.b16 %v1445
    %v1478 = vunpack.c.l.b16 %v1446
    %v1479 = vunpack.c.l.b16 %v1447
    %v1480 = vunpack.c.l.b16 %v1448
    %v1481 = vunpack.c.l.b16 %v1449
    %v1482 = vunpack.c.l.b16 %v1450
    %v1483 = vunpack.c.l.b16 %v1451
    %v1484 = vunpack.c.l.b16 %v1452
    %v1485 = vpack.c.b16 %v1470, %v1469
    %v1486 = vpack.c.b16 %v1472, %v1471
    %v1487 = vpack.c.b16 %v1474, %v1473
    %v1488 = vpack.c.b16 %v1476, %v1475
    %v1489 = vpack.c.b16 %v1478, %v1477
    %v1490 = vpack.c.b16 %v1480, %v1479
    %v1491 = vpack.c.b16 %v1482, %v1481
    %v1492 = vpack.c.b16 %v1484, %v1483
    %1501 = vmatprep.subr.bf16.mxu0 0
    %1502 = vmatpush1.bf16.msra.mxu0 %v1485
    %1503 = vmatprep.subr.bf16.mxu0 0
    %1504 = vmatpush1.bf16.msra.mxu0 %v1486
    %1505 = vmatprep.subr.bf16.mxu0 0
    %1506 = vmatpush1.bf16.msra.mxu0 %v1487
    %1507 = vmatprep.subr.bf16.mxu0 0
    %1508 = vmatpush1.bf16.msra.mxu0 %v1488
    %1509 = vmatprep.subr.bf16.mxu0 0
    %1510 = vmatpush1.bf16.msra.mxu0 %v1489
    %1511 = vmatprep.subr.bf16.mxu0 0
    %1512 = vmatpush1.bf16.msra.mxu0 %v1490
    %1513 = vmatprep.subr.bf16.mxu0 0
    %1514 = vmatpush1.bf16.msra.mxu0 %v1491
    %1515 = vmatprep.subr.bf16.mxu0 0
    %1516 = vmatpush1.bf16.msra.mxu0 %v1492
    %1517 = vmatprep.subr.bf16.mxu0 0
    %1518 = vmatpush1.bf16.msra.mxu0 0
    %1519 = vmatprep.subr.bf16.mxu0 0
    %1520 = vmatpush1.bf16.msra.mxu0 0
    %1521 = vmatprep.subr.bf16.mxu0 0
    %1522 = vmatpush1.bf16.msra.mxu0 0
    %1523 = vmatprep.subr.bf16.mxu0 0
    %1524 = vmatpush1.bf16.msra.mxu0 0
    %1525 = vmatprep.subr.bf16.mxu0 0
    %1526 = vmatpush1.bf16.msra.mxu0 0
    %1527 = vmatprep.subr.bf16.mxu0 0
    %1528 = vmatpush1.bf16.msra.mxu0 0
    %1529 = vmatprep.subr.bf16.mxu0 0
    %1530 = vmatpush1.bf16.msra.mxu0 0
    %1531 = vmatprep.subr.bf16.mxu0 0
    %1532 = vmatpush1.bf16.msra.mxu0 0
    %1533 = vmatprep.mubr.bf16.mxu0 0
    %1534 = vmatmul.mubr.bf16.gmra.mrb[0].mxu0 %v1435
    %v1535 = vpop.f32.mrb[0].mxu0
    %v1536 = vadd.f32 0.0, %v1535
    %v1537 = vpop.f32.mrb[0].mxu0
    %v1538 = vpop.f32.mrb[0].mxu0
    %v1539 = vpop.f32.mrb[0].mxu0
    %1540 = vdwg.mxu0
    %v1541 = vadd.f32 %v1433, %v1536
    %v1542 = vld [vmem:[#allocation2 + $0xe] sm:$0x3]
    %v1543 = vpack.c.bf16 %v1542, %v1542
    %s1544 = scalar_lea.vmem [#allocation6], 448
    %v1545 = vld [vmem:[%s1544] sm:$0xf]
    %v1546 = vld [vmem:[%s1544 + $0x4] sm:$0xf]
    %v1547 = vld [vmem:[%s1544 + $0x8] sm:$0xf]
    %v1548 = vld [vmem:[%s1544 + $0xc] sm:$0xf]
    %v1549 = vld [vmem:[%s1544 + $0x10] sm:$0xf]
    %v1550 = vld [vmem:[%s1544 + $0x14] sm:$0xf]
    %v1551 = vld [vmem:[%s1544 + $0x18] sm:$0xf]
    %v1552 = vld [vmem:[%s1544 + $0x1c] sm:$0xf]
    %v1553 = vld [vmem:[%s1544 + $0x20] sm:$0xf]
    %v1554 = vld [vmem:[%s1544 + $0x24] sm:$0xf]
    %v1555 = vld [vmem:[%s1544 + $0x28] sm:$0xf]
    %v1556 = vld [vmem:[%s1544 + $0x2c] sm:$0xf]
    %v1557 = vld [vmem:[%s1544 + $0x30] sm:$0xf]
    %v1558 = vld [vmem:[%s1544 + $0x34] sm:$0xf]
    %v1559 = vld [vmem:[%s1544 + $0x38] sm:$0xf]
    %v1560 = vld [vmem:[%s1544 + $0x3c] sm:$0xf]
    %v1577 = vunpack.c.l.b16 %v1545
    %v1578 = vunpack.c.l.b16 %v1546
    %v1579 = vunpack.c.l.b16 %v1547
    %v1580 = vunpack.c.l.b16 %v1548
    %v1581 = vunpack.c.l.b16 %v1549
    %v1582 = vunpack.c.l.b16 %v1550
    %v1583 = vunpack.c.l.b16 %v1551
    %v1584 = vunpack.c.l.b16 %v1552
    %v1585 = vunpack.c.l.b16 %v1553
    %v1586 = vunpack.c.l.b16 %v1554
    %v1587 = vunpack.c.l.b16 %v1555
    %v1588 = vunpack.c.l.b16 %v1556
    %v1589 = vunpack.c.l.b16 %v1557
    %v1590 = vunpack.c.l.b16 %v1558
    %v1591 = vunpack.c.l.b16 %v1559
    %v1592 = vunpack.c.l.b16 %v1560
    %v1593 = vpack.c.b16 %v1578, %v1577
    %v1594 = vpack.c.b16 %v1580, %v1579
    %v1595 = vpack.c.b16 %v1582, %v1581
    %v1596 = vpack.c.b16 %v1584, %v1583
    %v1597 = vpack.c.b16 %v1586, %v1585
    %v1598 = vpack.c.b16 %v1588, %v1587
    %v1599 = vpack.c.b16 %v1590, %v1589
    %v1600 = vpack.c.b16 %v1592, %v1591
    %1609 = vmatprep.subr.bf16.mxu0 0
    %1610 = vmatpush1.bf16.msra.mxu0 %v1593
    %1611 = vmatprep.subr.bf16.mxu0 0
    %1612 = vmatpush1.bf16.msra.mxu0 %v1594
    %1613 = vmatprep.subr.bf16.mxu0 0
    %1614 = vmatpush1.bf16.msra.mxu0 %v1595
    %1615 = vmatprep.subr.bf16.mxu0 0
    %1616 = vmatpush1.bf16.msra.mxu0 %v1596
    %1617 = vmatprep.subr.bf16.mxu0 0
    %1618 = vmatpush1.bf16.msra.mxu0 %v1597
    %1619 = vmatprep.subr.bf16.mxu0 0
    %1620 = vmatpush1.bf16.msra.mxu0 %v1598
    %1621 = vmatprep.subr.bf16.mxu0 0
    %1622 = vmatpush1.bf16.msra.mxu0 %v1599
    %1623 = vmatprep.subr.bf16.mxu0 0
    %1624 = vmatpush1.bf16.msra.mxu0 %v1600
    %1625 = vmatprep.subr.bf16.mxu0 0
    %1626 = vmatpush1.bf16.msra.mxu0 0
    %1627 = vmatprep.subr.bf16.mxu0 0
    %1628 = vmatpush1.bf16.msra.mxu0 0
    %1629 = vmatprep.subr.bf16.mxu0 0
    %1630 = vmatpush1.bf16.msra.mxu0 0
    %1631 = vmatprep.subr.bf16.mxu0 0
    %1632 = vmatpush1.bf16.msra.mxu0 0
    %1633 = vmatprep.subr.bf16.mxu0 0
    %1634 = vmatpush1.bf16.msra.mxu0 0
    %1635 = vmatprep.subr.bf16.mxu0 0
    %1636 = vmatpush1.bf16.msra.mxu0 0
    %1637 = vmatprep.subr.bf16.mxu0 0
    %1638 = vmatpush1.bf16.msra.mxu0 0
    %1639 = vmatprep.subr.bf16.mxu0 0
    %1640 = vmatpush1.bf16.msra.mxu0 0
    %1641 = vmatprep.mubr.bf16.mxu0 0
    %1642 = vmatmul.mubr.bf16.gmra.mrb[0].mxu0 %v1543
    %v1643 = vpop.f32.mrb[0].mxu0
    %v1644 = vadd.f32 0.0, %v1643
    %v1645 = vpop.f32.mrb[0].mxu0
    %v1646 = vpop.f32.mrb[0].mxu0
    %v1647 = vpop.f32.mrb[0].mxu0
    %1648 = vdwg.mxu0
    %v1649 = vadd.f32 %v1541, %v1644
    %v1650 = vld [vmem:[%s7] sm:$0x1]
    %v1652 = vlaneseq
    %v1653 = vshrl.u32 %v1652, 7
    %v1654 = vsub.s32 0, %v1653
    %v1655 = vrot.slane %v1650, %v1654
    %v1657 = vadd.f32 %v1649, %v1655
    %v1658 = vmax.f32 %v1657, 0.0
    %v1659 = vpack.c.bf16 %v1658, %v1658
    %v1660 = vld [vmem:[%s8] sm:$0xf]
    %v1661 = vld [vmem:[%s8 + $0x4] sm:$0xf]
    %v1662 = vld [vmem:[%s8 + $0x8] sm:$0xf]
    %v1663 = vld [vmem:[%s8 + $0xc] sm:$0xf]
    %v1664 = vld [vmem:[%s8 + $0x10] sm:$0xf]
    %v1665 = vld [vmem:[%s8 + $0x14] sm:$0xf]
    %v1666 = vld [vmem:[%s8 + $0x18] sm:$0xf]
    %v1667 = vld [vmem:[%s8 + $0x1c] sm:$0xf]
    %v1668 = vld [vmem:[%s8 + $0x20] sm:$0xf]
    %v1669 = vld [vmem:[%s8 + $0x24] sm:$0xf]
    %v1670 = vld [vmem:[%s8 + $0x28] sm:$0xf]
    %v1671 = vld [vmem:[%s8 + $0x2c] sm:$0xf]
    %v1672 = vld [vmem:[%s8 + $0x30] sm:$0xf]
    %v1673 = vld [vmem:[%s8 + $0x34] sm:$0xf]
    %v1674 = vld [vmem:[%s8 + $0x38] sm:$0xf]
    %v1675 = vld [vmem:[%s8 + $0x3c] sm:$0xf]
    %v1676 = vld [vmem:[%s9] sm:$0x1]
    %v1678 = vlaneseq
    %v1679 = vshrl.u32 %v1678, 7
    %v1680 = vsub.s32 0, %v1679
    %v1681 = vrot.slane %v1676, %v1680
    %v1699 = vunpack.c.l.b16 %v1660
    %v1700 = vunpack.c.l.b16 %v1661
    %v1701 = vunpack.c.l.b16 %v1662
    %v1702 = vunpack.c.l.b16 %v1663
    %v1703 = vunpack.c.l.b16 %v1664
    %v1704 = vunpack.c.l.b16 %v1665
    %v1705 = vunpack.c.l.b16 %v1666
    %v1706 = vunpack.c.l.b16 %v1667
    %v1707 = vunpack.c.l.b16 %v1668
    %v1708 = vunpack.c.l.b16 %v1669
    %v1709 = vunpack.c.l.b16 %v1670
    %v1710 = vunpack.c.l.b16 %v1671
    %v1711 = vunpack.c.l.b16 %v1672
    %v1712 = vunpack.c.l.b16 %v1673
    %v1713 = vunpack.c.l.b16 %v1674
    %v1714 = vunpack.c.l.b16 %v1675
    %v1715 = vpack.c.b16 %v1700, %v1699
    %v1716 = vpack.c.b16 %v1702, %v1701
    %v1717 = vpack.c.b16 %v1704, %v1703
    %v1718 = vpack.c.b16 %v1706, %v1705
    %v1719 = vpack.c.b16 %v1708, %v1707
    %v1720 = vpack.c.b16 %v1710, %v1709
    %v1721 = vpack.c.b16 %v1712, %v1711
    %v1722 = vpack.c.b16 %v1714, %v1713
    %1731 = vmatprep.subr.bf16.mxu0 0
    %1732 = vmatpush1.bf16.msra.mxu0 %v1715
    %1733 = vmatprep.subr.bf16.mxu0 0
    %1734 = vmatpush1.bf16.msra.mxu0 %v1716
    %1735 = vmatprep.subr.bf16.mxu0 0
    %1736 = vmatpush1.bf16.msra.mxu0 %v1717
    %1737 = vmatprep.subr.bf16.mxu0 0
    %1738 = vmatpush1.bf16.msra.mxu0 %v1718
    %1739 = vmatprep.subr.bf16.mxu0 0
    %1740 = vmatpush1.bf16.msra.mxu0 %v1719
    %1741 = vmatprep.subr.bf16.mxu0 0
    %1742 = vmatpush1.bf16.msra.mxu0 %v1720
    %1743 = vmatprep.subr.bf16.mxu0 0
    %1744 = vmatpush1.bf16.msra.mxu0 %v1721
    %1745 = vmatprep.subr.bf16.mxu0 0
    %1746 = vmatpush1.bf16.msra.mxu0 %v1722
    %1747 = vmatprep.subr.bf16.mxu0 0
    %1748 = vmatpush1.bf16.msra.mxu0 0
    %1749 = vmatprep.subr.bf16.mxu0 0
    %1750 = vmatpush1.bf16.msra.mxu0 0
    %1751 = vmatprep.subr.bf16.mxu0 0
    %1752 = vmatpush1.bf16.msra.mxu0 0
    %1753 = vmatprep.subr.bf16.mxu0 0
    %1754 = vmatpush1.bf16.msra.mxu0 0
    %1755 = vmatprep.subr.bf16.mxu0 0
    %1756 = vmatpush1.bf16.msra.mxu0 0
    %1757 = vmatprep.subr.bf16.mxu0 0
    %1758 = vmatpush1.bf16.msra.mxu0 0
    %1759 = vmatprep.subr.bf16.mxu0 0
    %1760 = vmatpush1.bf16.msra.mxu0 0
    %1761 = vmatprep.subr.bf16.mxu0 0
    %1762 = vmatpush1.bf16.msra.mxu0 0
    %1763 = vmatprep.mubr.bf16.mxu0 0
    %1764 = vmatmul.mubr.bf16.gmra.mrb[0].mxu0 %v1659
    %v1765 = vpop.f32.mrb[0].mxu0
    %v1766 = vadd.f32 %v1681, %v1765
    %v1767 = vpop.f32.mrb[0].mxu0
    %v1768 = vpop.f32.mrb[0].mxu0
    %v1769 = vpop.f32.mrb[0].mxu0
    %1770 = vdwg.mxu0
    %v1771 = vmax.f32 %v1766, 0.0
    %v1772 = vpack.c.bf16 %v1771, %v1771
    %v1773 = vld [vmem:[%s10] sm:$0xf]
    %v1774 = vld [vmem:[%s10 + $0x4] sm:$0xf]
    %v1775 = vld [vmem:[%s10 + $0x8] sm:$0xf]
    %v1776 = vld [vmem:[%s10 + $0xc] sm:$0xf]
    %v1777 = vld [vmem:[%s10 + $0x10] sm:$0xf]
    %v1778 = vld [vmem:[%s10 + $0x14] sm:$0xf]
    %v1779 = vld [vmem:[%s10 + $0x18] sm:$0xf]
    %v1780 = vld [vmem:[%s10 + $0x1c] sm:$0xf]
    %v1781 = vld [vmem:[%s11] sm:$0x1]
    %v1783 = vlaneseq
    %v1784 = vshrl.u32 %v1783, 7
    %v1785 = vsub.s32 0, %v1784
    %v1786 = vrot.slane %v1781, %v1785
    %v1796 = vunpack.c.l.b16 %v1773
    %v1797 = vunpack.c.l.b16 %v1774
    %v1798 = vunpack.c.l.b16 %v1775
    %v1799 = vunpack.c.l.b16 %v1776
    %v1800 = vunpack.c.l.b16 %v1777
    %v1801 = vunpack.c.l.b16 %v1778
    %v1802 = vunpack.c.l.b16 %v1779
    %v1803 = vunpack.c.l.b16 %v1780
    %v1804 = vpack.c.b16 %v1797, %v1796
    %v1805 = vpack.c.b16 %v1799, %v1798
    %v1806 = vpack.c.b16 %v1801, %v1800
    %v1807 = vpack.c.b16 %v1803, %v1802
    %vm1812 = vcmask 523264
    %v1814 = vsel %vm1812, %v1772, 0
    %1816 = vmatprep.subr.bf16.mxu0 0
    %1817 = vmatpush1.bf16.msra.mxu0 %v1804
    %1818 = vmatprep.subr.bf16.mxu0 0
    %1819 = vmatpush1.bf16.msra.mxu0 %v1805
    %1820 = vmatprep.subr.bf16.mxu0 0
    %1821 = vmatpush1.bf16.msra.mxu0 %v1806
    %1822 = vmatprep.subr.bf16.mxu0 0
    %1823 = vmatpush1.bf16.msra.mxu0 %v1807
    %1824 = vmatprep.subr.bf16.mxu0 0
    %1825 = vmatpush1.bf16.msra.mxu0 0
    %1826 = vmatprep.subr.bf16.mxu0 0
    %1827 = vmatpush1.bf16.msra.mxu0 0
    %1828 = vmatprep.subr.bf16.mxu0 0
    %1829 = vmatpush1.bf16.msra.mxu0 0
    %1830 = vmatprep.subr.bf16.mxu0 0
    %1831 = vmatpush1.bf16.msra.mxu0 0
    %1832 = vmatprep.subr.bf16.mxu0 0
    %1833 = vmatpush1.bf16.msra.mxu0 0
    %1834 = vmatprep.subr.bf16.mxu0 0
    %1835 = vmatpush1.bf16.msra.mxu0 0
    %1836 = vmatprep.subr.bf16.mxu0 0
    %1837 = vmatpush1.bf16.msra.mxu0 0
    %1838 = vmatprep.subr.bf16.mxu0 0
    %1839 = vmatpush1.bf16.msra.mxu0 0
    %1840 = vmatprep.subr.bf16.mxu0 0
    %1841 = vmatpush1.bf16.msra.mxu0 0
    %1842 = vmatprep.subr.bf16.mxu0 0
    %1843 = vmatpush1.bf16.msra.mxu0 0
    %1844 = vmatprep.subr.bf16.mxu0 0
    %1845 = vmatpush1.bf16.msra.mxu0 0
    %1846 = vmatprep.subr.bf16.mxu0 0
    %1847 = vmatpush1.bf16.msra.mxu0 0
    %1848 = vmatprep.mubr.bf16.mxu0 0
    %1849 = vmatmul.mubr.bf16.gmra.mrb[0].mxu0 %v1814
    %v1850 = vpop.f32.mrb[0].mxu0
    %v1851 = vadd.f32 %v1786, %v1850
    %v1852 = vpop.f32.mrb[0].mxu0
    %v1853 = vpop.f32.mrb[0].mxu0
    %v1854 = vpop.f32.mrb[0].mxu0
    %1855 = vdwg.mxu0
    %vm1856 = vcmask 58368
    %1857 = vst.msk [vmem:[#allocation8] sm:$0x3] %vm1856, %v1851
    // Predicated region
    $region58: #{tpu_custom_call.1} parent=1 // pred_check
      _
    $region59: #{tpu_custom_call.1} parent=1 // pred_check_branch
      %1859 = sbr.rel (0) target = $region61
    $region60: #{tpu_custom_call.1} parent=1 // pred_region
      %s1861 = ssub.s32 32, 32
      %1862 = vsyncadd [#allocation5], %s1861
      %s1864 = sshll.u32 [#allocation8], 4
      %s1865 = int_to_ptr.vmem [resolvable:$true] %s1864
      %1867 = dma.vmem_to_hbm [thread:$0]  %s1865, 32, %s12, [#allocation5]
    $region61: #{tpu_custom_call.1} parent=1 // pred_fallthru
      _
    // Predicated region
    $region62: #{tpu_custom_call.1} parent=1 // pred_check
      _
    $region63: #{tpu_custom_call.1} parent=1 // pred_check_branch
      %1869 = sbr.rel (0) target = $region65
    $region64: #{tpu_custom_call.1} parent=1 // pred_region
      %1870 = dma.done [#allocation5], 32
    $region65: #{tpu_custom_call.1} parent=1 // pred_fallthru
      _
    %1871 = vsyncpa [#allocation4], 1
    %1872 = vsyncpa [#allocation7], 1
    %1873 = vsyncpa [#allocation5], 1

</llo_original>
